<compile_context>
chip_gen: v5e
topology: v5e:2x2
jax: 0.10.0
libtpu: 0.0.40
codegen_flags: <defaults>
</compile_context>

<pallas_src>
import functools

import jax
import jax.numpy as jnp
from jax.experimental import pallas as pl
from jax.experimental.pallas import tpu as pltpu

IN_FEATURES = 784
ENCODING_DIM = 32
ENC_PAD = 128           # hidden width padded to one full 128-lane vreg (keep at 128)

# Flipped to False automatically if this jax build rejects pipeline_mode=pl.Buffered(1).
_SINGLE_BUFFER_WEIGHTS = True


def _round_up(n, m):
    return ((n + m - 1) // m) * m


@functools.lru_cache(maxsize=1)
def _device_tuning():
    """Returns (tile_b_cap, vmem_limit_bytes), generation dependent."""
    vmem_bytes = 64 * 1024 * 1024          # conservative fallback == v7x per-TC VMEM
    try:
        vmem_bytes = int(pltpu.get_tpu_info().vmem_capacity_bytes)
    except Exception:
        pass
    if vmem_bytes > 96 * 1024 * 1024:      # v5e / v6e: 128 MiB physical VMEM
        return 2048, 64 * 1024 * 1024
    return 1024, 48 * 1024 * 1024          # v7x: 64 MiB per TC -> cap tile_b at 1024


# ---------------------------------------------------------------------------
# Kernel: fused encoder(Linear+ReLU) + decoder(Linear+sigmoid) on one batch tile.
# Weights/biases are small (~0.8 MiB total) and stay resident in VMEM for every step.
# ---------------------------------------------------------------------------
def autoencoder_kernel(x_ref, w1_ref, b1_ref, w2_ref, b2_ref, out_ref):
    # encoder: (TB, 784) @ (784, 128) -> (TB, 128), + bias, ReLU
    h = jnp.dot(x_ref[...], w1_ref[...], preferred_element_type=jnp.float32)
    h = jnp.maximum(h + b1_ref[...], 0.0)
    # decoder: (TB, 128) @ (128, 784) -> (TB, 784), + bias, sigmoid
    y = jnp.dot(h, w2_ref[...], preferred_element_type=jnp.float32)
    # TODO(synk): on v7x only, an EUP-routed sigmoid (exp + pl.reciprocal(approx=True))
    # and/or bf16 matmul inputs shave VALU/MXU work, but break the 1e-5 reference check.
    out_ref[...] = jax.nn.sigmoid(y + b2_ref[...]).astype(out_ref.dtype)


# ---------------------------------------------------------------------------
# One-time parameter prep (hoisted out of the per-call forward path):
# transpose PyTorch-layout weights to (in, out) and zero-pad enc -> ENC_PAD.
# ---------------------------------------------------------------------------
def prepare_params(w1, b1, w2, b2, enc_pad=ENC_PAD):
    """w1: (enc, 784); b1: (enc,); w2: (784, enc); b2: (784,)."""
    enc, d_in = w1.shape
    d_out = w2.shape[0]
    assert d_in == IN_FEATURES and d_out == IN_FEATURES and enc <= enc_pad
    w1_t = jnp.zeros((d_in, enc_pad), jnp.float32).at[:, :enc].set(
        w1.T.astype(jnp.float32))                       # (784, 128), padded cols = 0
    b1_p = jnp.zeros((1, enc_pad), jnp.float32).at[:, :enc].set(
        b1.astype(jnp.float32)[None, :])                # (1, 128), padded = 0
    w2_t = jnp.zeros((enc_pad, d_out), jnp.float32).at[:enc, :].set(
        w2.T.astype(jnp.float32))                       # (128, 784), padded rows = 0
    b2_p = b2.astype(jnp.float32).reshape(1, d_out)     # (1, 784)
    return w1_t, b1_p, w2_t, b2_p


@functools.partial(jax.jit,
                   static_argnames=("tile_b", "vmem_limit_bytes", "single_buffer_weights"))
def _autoencoder_pallas(x, w1_t, b1_p, w2_t, b2_p, *, tile_b, vmem_limit_bytes,
                        single_buffer_weights):
    B, D = x.shape
    enc_pad = w1_t.shape[1]
    grid = (pl.cdiv(B, tile_b),)            # partial last block is masked on writeback

    # Advisory cost estimate for XLA scheduling around the custom call.
    flops = 4 * B * D * enc_pad                     # two matmuls, 2*M*N*K each
    transcendentals = B * D                         # sigmoid exp per output element
    bytes_accessed = 4 * (2 * B * D + 2 * D * enc_pad + enc_pad + D)

    # Resident (constant index_map) params: single-buffered to save VMEM headroom.
    wkw = dict(pipeline_mode=pl.Buffered(1)) if single_buffer_weights else {}

    return pl.pallas_call(
        autoencoder_kernel,
        out_shape=jax.ShapeDtypeStruct((B, D), x.dtype),
        grid_spec=pltpu.PrefetchScalarGridSpec(
            num_scalar_prefetch=0,
            grid=grid,
            in_specs=[
                pl.BlockSpec((tile_b, D), lambda i: (i, 0)),              # x tile
                pl.BlockSpec((D, enc_pad), lambda i: (0, 0), **wkw),      # W1^T (resident)
                pl.BlockSpec((1, enc_pad), lambda i: (0, 0), **wkw),      # b1
                pl.BlockSpec((enc_pad, D), lambda i: (0, 0), **wkw),      # W2^T (resident)
                pl.BlockSpec((1, D), lambda i: (0, 0), **wkw),            # b2
            ],
            out_specs=pl.BlockSpec((tile_b, D), lambda i: (i, 0)),  # 784 = 6 full vregs
            # + 1 masked tail; left unpadded on purpose (padding adds HBM traffic).
        ),
        compiler_params=pltpu.CompilerParams(
            dimension_semantics=("parallel",),          # shard batch tiles across TCs
            vmem_limit_bytes=vmem_limit_bytes,          # generation-dependent headroom
        ),
        cost_estimate=pl.CostEstimate(
            flops=flops,
            transcendentals=transcendentals,
            bytes_accessed=bytes_accessed,
        ),
    )(x, w1_t, b1_p, w2_t, b2_p)


def autoencoder_forward(x, params, *, tile_b=None):
    """x: (B, 784) float32; params: output of prepare_params(). Handles any B."""
    global _SINGLE_BUFFER_WEIGHTS
    w1_t, b1_p, w2_t, b2_p = params
    B, D = x.shape
    assert D == IN_FEATURES

    tile_cap, vmem_limit = _device_tuning()
    if tile_b is None:
        tile_b = tile_cap

    if B <= tile_b:
        # Give the grid >= 2 steps when B >= 16 so "parallel" batch sharding can use
        # both v7x TensorCores (harmless on 1-TC v5e/v6e). Tiles stay multiples of 8.
        tile_b_eff = _round_up(pl.cdiv(B, 2), 8) if B >= 16 else 8
    else:
        tile_b_eff = tile_b

    try:
        return _autoencoder_pallas(x, w1_t, b1_p, w2_t, b2_p, tile_b=tile_b_eff,
                                   vmem_limit_bytes=vmem_limit,
                                   single_buffer_weights=_SINGLE_BUFFER_WEIGHTS)
    except Exception:
        if not _SINGLE_BUFFER_WEIGHTS:
            raise
        # Fallback for jax builds that reject pl.Buffered(1) on a pallas_call BlockSpec.
        _SINGLE_BUFFER_WEIGHTS = False
        return _autoencoder_pallas(x, w1_t, b1_p, w2_t, b2_p, tile_b=tile_b_eff,
                                   vmem_limit_bytes=vmem_limit,
                                   single_buffer_weights=False)


# ---------------------------------------------------------------------------
# Reference + init (mimic nn.Linear's uniform(-1/sqrt(fan_in), +1/sqrt(fan_in)))
# ---------------------------------------------------------------------------
def init_params_torch_layout(key, encoding_dim=ENCODING_DIM):
    k1, k2, k3, k4 = jax.random.split(key, 4)
    bound1 = 1.0 / jnp.sqrt(IN_FEATURES)
    bound2 = 1.0 / jnp.sqrt(encoding_dim)
    w1 = jax.random.uniform(k1, (encoding_dim, IN_FEATURES), jnp.float32, -bound1, bound1)
    b1 = jax.random.uniform(k2, (encoding_dim,), jnp.float32, -bound1, bound1)
    w2 = jax.random.uniform(k3, (IN_FEATURES, encoding_dim), jnp.float32, -bound2, bound2)
    b2 = jax.random.uniform(k4, (IN_FEATURES,), jnp.float32, -bound2, bound2)
    return w1, b1, w2, b2


def reference_forward(x, w1, b1, w2, b2):
    h = jax.nn.relu(x @ w1.T + b1)
    return jax.nn.sigmoid(h @ w2.T + b2)


if __name__ == "__main__":
    key = jax.random.PRNGKey(0)
    kx, kp = jax.random.split(key)

    w1, b1, w2, b2 = init_params_torch_layout(kp)
    params = prepare_params(w1, b1, w2, b2)       # one-time prep, hoisted from forward

    # Small batch; >= 16 so the 2-step grid floor (v7x TC sharding) is exercised.
    B = 16
    x = jax.random.normal(kx, (B, IN_FEATURES), jnp.float32)
    out = jax.block_until_ready(autoencoder_forward(x, params))
    ref = reference_forward(x, w1, b1, w2, b2)
    assert out.shape == (B, IN_FEATURES)
    assert jnp.allclose(out, ref, atol=1e-5, rtol=1e-5)

    # Ragged batch (not a multiple of the tile) exercises the masked partial last block.
    B2 = 13
    x2 = jax.random.normal(kx, (B2, IN_FEATURES), jnp.float32)
    out2 = jax.block_until_ready(autoencoder_forward(x2, params))
    ref2 = reference_forward(x2, w1, b1, w2, b2)
    assert out2.shape == (B2, IN_FEATURES)
    assert jnp.allclose(out2, ref2, atol=1e-5, rtol=1e-5)

    print("KERNEL_OK")
</pallas_src>

<mosaic_0001>
module attributes {stable_mosaic.version = 11 : i64} {
  func.func @autoencoder_kernel(%arg0: i32, %arg1: memref<8x784xf32, #tpu.memory_space<vmem>>, %arg2: memref<784x128xf32, #tpu.memory_space<vmem>>, %arg3: memref<1x128xf32, #tpu.memory_space<vmem>>, %arg4: memref<128x784xf32, #tpu.memory_space<vmem>>, %arg5: memref<1x784xf32, #tpu.memory_space<vmem>>, %arg6: memref<8x784xf32, #tpu.memory_space<vmem>>) attributes {dimension_semantics = [#tpu.dimension_semantics<parallel>], iteration_bounds = array<i64: 2>, scalar_prefetch = 0 : i64, scratch_operands = 0 : i64, tpu.core_type = #tpu.core_type<tc>, window_params = [{transform_indices = @transform_0, window_bounds = array<i64: 8, 784>}, {pipeline_mode = #tpu.pipeline_mode<synchronous>, transform_indices = @transform_1, window_bounds = array<i64: 784, 128>}, {pipeline_mode = #tpu.pipeline_mode<synchronous>, transform_indices = @transform_2, window_bounds = array<i64: 1, 128>}, {pipeline_mode = #tpu.pipeline_mode<synchronous>, transform_indices = @transform_3, window_bounds = array<i64: 128, 784>}, {pipeline_mode = #tpu.pipeline_mode<synchronous>, transform_indices = @transform_4, window_bounds = array<i64: 1, 784>}, {transform_indices = @transform_5, window_bounds = array<i64: 8, 784>}]} {
    %c0 = arith.constant 0 : index
    %c0_0 = arith.constant 0 : index
    %0 = vector.load %arg1[%c0, %c0_0] : memref<8x784xf32, #tpu.memory_space<vmem>>, vector<8x784xf32>
    %c0_1 = arith.constant 0 : index
    %c0_2 = arith.constant 0 : index
    %1 = vector.load %arg2[%c0_1, %c0_2] : memref<784x128xf32, #tpu.memory_space<vmem>>, vector<784x128xf32>
    %cst = arith.constant dense<0.000000e+00> : vector<8x128xf32>
    %2 = tpu.matmul %0, %1, %cst {dimension_numbers = #tpu.dot_dimension_numbers<[1], [0], [0], [1], [0, 0, 1, 1], [], []>} : vector<8x784xf32>, vector<784x128xf32>, vector<8x128xf32> -> vector<8x128xf32>
    %c0_3 = arith.constant 0 : index
    %c0_4 = arith.constant 0 : index
    %3 = vector.load %arg3[%c0_3, %c0_4] : memref<1x128xf32, #tpu.memory_space<vmem>>, vector<1x128xf32>
    %4 = vector.broadcast %3 : vector<1x128xf32> to vector<8x128xf32>
    %5 = arith.addf %2, %4 : vector<8x128xf32>
    %cst_5 = arith.constant 0.000000e+00 : f32
    %6 = vector.broadcast %cst_5 : f32 to vector<8x128xf32>
    %7 = arith.maximumf %5, %6 : vector<8x128xf32>
    %c0_6 = arith.constant 0 : index
    %c0_7 = arith.constant 0 : index
    %8 = vector.load %arg4[%c0_6, %c0_7] : memref<128x784xf32, #tpu.memory_space<vmem>>, vector<128x784xf32>
    %cst_8 = arith.constant dense<0.000000e+00> : vector<8x784xf32>
    %9 = tpu.matmul %7, %8, %cst_8 {dimension_numbers = #tpu.dot_dimension_numbers<[1], [0], [0], [1], [0, 0, 1, 1], [], []>} : vector<8x128xf32>, vector<128x784xf32>, vector<8x784xf32> -> vector<8x784xf32>
    %c0_9 = arith.constant 0 : index
    %c0_10 = arith.constant 0 : index
    %10 = vector.load %arg5[%c0_9, %c0_10] : memref<1x784xf32, #tpu.memory_space<vmem>>, vector<1x784xf32>
    %11 = vector.broadcast %10 : vector<1x784xf32> to vector<8x784xf32>
    %12 = arith.addf %9, %11 : vector<8x784xf32>
    %13 = arith.negf %12 : vector<8x784xf32>
    %14 = math.exp %13 : vector<8x784xf32>
    %cst_11 = arith.constant 1.000000e+00 : f32
    %15 = vector.broadcast %cst_11 : f32 to vector<8x784xf32>
    %16 = arith.addf %15, %14 : vector<8x784xf32>
    %17 = arith.divf %15, %16 : vector<8x784xf32>
    %c0_12 = arith.constant 0 : index
    %c0_13 = arith.constant 0 : index
    %18 = vector.load %arg6[%c0_12, %c0_13] : memref<8x784xf32, #tpu.memory_space<vmem>>, vector<8x784xf32>
    tpu.vector_store %arg6[%c0_12, %c0_13], %17 {strides = array<i32>} : memref<8x784xf32, #tpu.memory_space<vmem>>, vector<8x784xf32>,
    return
  }
  func.func @transform_0(%arg0: i32) -> (i32, i32) {
    %c0_i32 = arith.constant 0 : i32
    %c0_i32_0 = arith.constant 0 : i32
    return %arg0, %c0_i32 : i32, i32
  }
  func.func @transform_1(%arg0: i32) -> (i32, i32) {
    %c0_i32 = arith.constant 0 : i32
    %c0_i32_0 = arith.constant 0 : i32
    %c0_i32_1 = arith.constant 0 : i32
    return %c0_i32, %c0_i32_0 : i32, i32
  }
  func.func @transform_2(%arg0: i32) -> (i32, i32) {
    %c0_i32 = arith.constant 0 : i32
    %c0_i32_0 = arith.constant 0 : i32
    %c0_i32_1 = arith.constant 0 : i32
    return %c0_i32, %c0_i32_0 : i32, i32
  }
  func.func @transform_3(%arg0: i32) -> (i32, i32) {
    %c0_i32 = arith.constant 0 : i32
    %c0_i32_0 = arith.constant 0 : i32
    %c0_i32_1 = arith.constant 0 : i32
    return %c0_i32, %c0_i32_0 : i32, i32
  }
  func.func @transform_4(%arg0: i32) -> (i32, i32) {
    %c0_i32 = arith.constant 0 : i32
    %c0_i32_0 = arith.constant 0 : i32
    %c0_i32_1 = arith.constant 0 : i32
    return %c0_i32, %c0_i32_0 : i32, i32
  }
  func.func @transform_5(%arg0: i32) -> (i32, i32) {
    %c0_i32 = arith.constant 0 : i32
    %c0_i32_0 = arith.constant 0 : i32
    return %arg0, %c0_i32 : i32, i32
  }
}

module attributes {stable_mosaic.version = 11 : i64} {
  func.func @autoencoder_kernel(%arg0: i32, %arg1: memref<8x784xf32, #tpu.memory_space<vmem>>, %arg2: memref<784x128xf32, #tpu.memory_space<vmem>>, %arg3: memref<1x128xf32, #tpu.memory_space<vmem>>, %arg4: memref<128x784xf32, #tpu.memory_space<vmem>>, %arg5: memref<1x784xf32, #tpu.memory_space<vmem>>, %arg6: memref<8x784xf32, #tpu.memory_space<vmem>>) attributes {dimension_semantics = [#tpu.dimension_semantics<parallel>], iteration_bounds = array<i64: 2>, scalar_prefetch = 0 : i64, scratch_operands = 0 : i64, tpu.core_type = #tpu.core_type<tc>, window_params = [{transform_indices = @transform_0, window_bounds = array<i64: 8, 784>}, {pipeline_mode = #tpu.pipeline_mode<synchronous>, transform_indices = @transform_1, window_bounds = array<i64: 784, 128>}, {pipeline_mode = #tpu.pipeline_mode<synchronous>, transform_indices = @transform_2, window_bounds = array<i64: 1, 128>}, {pipeline_mode = #tpu.pipeline_mode<synchronous>, transform_indices = @transform_3, window_bounds = array<i64: 128, 784>}, {pipeline_mode = #tpu.pipeline_mode<synchronous>, transform_indices = @transform_4, window_bounds = array<i64: 1, 784>}, {transform_indices = @transform_5, window_bounds = array<i64: 8, 784>}]} {
    %c0 = arith.constant 0 : index
    %c0_0 = arith.constant 0 : index
    %0 = vector.load %arg1[%c0, %c0_0] : memref<8x784xf32, #tpu.memory_space<vmem>>, vector<8x784xf32>
    %c0_1 = arith.constant 0 : index
    %c0_2 = arith.constant 0 : index
    %1 = vector.load %arg2[%c0_1, %c0_2] : memref<784x128xf32, #tpu.memory_space<vmem>>, vector<784x128xf32>
    %cst = arith.constant dense<0.000000e+00> : vector<8x128xf32>
    %2 = tpu.matmul %0, %1, %cst {dimension_numbers = #tpu.dot_dimension_numbers<[1], [0], [0], [1], [0, 0, 1, 1], [], []>} : vector<8x784xf32>, vector<784x128xf32>, vector<8x128xf32> -> vector<8x128xf32>
    %c0_3 = arith.constant 0 : index
    %c0_4 = arith.constant 0 : index
    %3 = vector.load %arg3[%c0_3, %c0_4] : memref<1x128xf32, #tpu.memory_space<vmem>>, vector<1x128xf32>
    %4 = vector.broadcast %3 : vector<1x128xf32> to vector<8x128xf32>
    %5 = arith.addf %2, %4 : vector<8x128xf32>
    %cst_5 = arith.constant 0.000000e+00 : f32
    %6 = vector.broadcast %cst_5 : f32 to vector<8x128xf32>
    %7 = arith.maximumf %5, %6 : vector<8x128xf32>
    %c0_6 = arith.constant 0 : index
    %c0_7 = arith.constant 0 : index
    %8 = vector.load %arg4[%c0_6, %c0_7] : memref<128x784xf32, #tpu.memory_space<vmem>>, vector<128x784xf32>
    %cst_8 = arith.constant dense<0.000000e+00> : vector<8x784xf32>
    %9 = tpu.matmul %7, %8, %cst_8 {dimension_numbers = #tpu.dot_dimension_numbers<[1], [0], [0], [1], [0, 0, 1, 1], [], []>} : vector<8x128xf32>, vector<128x784xf32>, vector<8x784xf32> -> vector<8x784xf32>
    %c0_9 = arith.constant 0 : index
    %c0_10 = arith.constant 0 : index
    %10 = vector.load %arg5[%c0_9, %c0_10] : memref<1x784xf32, #tpu.memory_space<vmem>>, vector<1x784xf32>
    %11 = vector.broadcast %10 : vector<1x784xf32> to vector<8x784xf32>
    %12 = arith.addf %9, %11 : vector<8x784xf32>
    %13 = arith.negf %12 : vector<8x784xf32>
    %14 = math.exp %13 : vector<8x784xf32>
    %cst_11 = arith.constant 1.000000e+00 : f32
    %15 = vector.broadcast %cst_11 : f32 to vector<8x784xf32>
    %16 = arith.addf %15, %14 : vector<8x784xf32>
    %17 = arith.divf %15, %16 : vector<8x784xf32>
    %c0_12 = arith.constant 0 : index
    %c0_13 = arith.constant 0 : index
    %18 = vector.load %arg6[%c0_12, %c0_13] : memref<8x784xf32, #tpu.memory_space<vmem>>, vector<8x784xf32>
    tpu.vector_store %arg6[%c0_12, %c0_13], %17 {strides = array<i32>} : memref<8x784xf32, #tpu.memory_space<vmem>>, vector<8x784xf32>,
    return
  }
  func.func @transform_0(%arg0: i32) -> (i32, i32) {
    %c0_i32 = arith.constant 0 : i32
    %c0_i32_0 = arith.constant 0 : i32
    return %arg0, %c0_i32 : i32, i32
  }
  func.func @transform_1(%arg0: i32) -> (i32, i32) {
    %c0_i32 = arith.constant 0 : i32
    %c0_i32_0 = arith.constant 0 : i32
    %c0_i32_1 = arith.constant 0 : i32
    return %c0_i32, %c0_i32_0 : i32, i32
  }
  func.func @transform_2(%arg0: i32) -> (i32, i32) {
    %c0_i32 = arith.constant 0 : i32
    %c0_i32_0 = arith.constant 0 : i32
    %c0_i32_1 = arith.constant 0 : i32
    return %c0_i32, %c0_i32_0 : i32, i32
  }
  func.func @transform_3(%arg0: i32) -> (i32, i32) {
    %c0_i32 = arith.constant 0 : i32
    %c0_i32_0 = arith.constant 0 : i32
    %c0_i32_1 = arith.constant 0 : i32
    return %c0_i32, %c0_i32_0 : i32, i32
  }
  func.func @transform_4(%arg0: i32) -> (i32, i32) {
    %c0_i32 = arith.constant 0 : i32
    %c0_i32_0 = arith.constant 0 : i32
    %c0_i32_1 = arith.constant 0 : i32
    return %c0_i32, %c0_i32_0 : i32, i32
  }
  func.func @transform_5(%arg0: i32) -> (i32, i32) {
    %c0_i32 = arith.constant 0 : i32
    %c0_i32_0 = arith.constant 0 : i32
    return %arg0, %c0_i32 : i32, i32
  }
}

</mosaic_0001>

<llo_original>
// kernel: _autoencoder_pallas.1
$region0: #{_autoencoder_pallas.1}
  #allocation0 [shape = 'u32[]', space=smem, size = 0x4, offset = 0x4, fixed_abs, tag = 'smem constant byte address 0x4 - core index']
  #allocation1 [shape = 'u32[72,128]{1,0:T(1,128)}', space=vmem, size = 0x9000, scoped, tag = 'internal scratch']
  %s0 = inlined_call_operand.vmem [shape: f32[16,784], index: 0, kind: input, shape index: {}]
  %s1 = inlined_call_operand.vmem [shape: f32[784,128], index: 1, kind: input, shape index: {}]
  %s2 = inlined_call_operand.vmem [shape: f32[1,128], index: 2, kind: input, shape index: {}]
  %s3 = inlined_call_operand.vmem [shape: f32[128,784], index: 3, kind: input, shape index: {}]
  %s4 = inlined_call_operand.vmem [shape: f32[1,784], index: 4, kind: input, shape index: {}]
  %s5 = inlined_call_operand.hbm [shape: f32[16,784], index: 5, kind: output, shape index: {}]
  %s6 = sld [smem:[#allocation0]]
  $region53: #{_autoencoder_pallas.1} parent=0
    _
  %s8 = ssub.s32 1, %s6
  %s9 = scalar_select 0, %s8, %s6
  $region1: #{_autoencoder_pallas.1} parent=0
    #allocation2 [shape = 'u8[57344]{0}', space=vmem, size = 0xe000, scoped, tag = 'output window, operand 0']
    #allocation3 [shape = 's32[2]{0}', space=sflag, size = 0x8, scoped, tag = 'scoped memory for _autoencoder_pallas.1']
    %10 = vsyncpa [#allocation3], 0
    %s11 = scalar_lea.sflag [#allocation3], 1
    %12 = vsyncpa %s11, 0
    loop: start=0, step=1, limit=4
    $region2: #{_autoencoder_pallas.1} parent=1 // loop_pre_header
      _
    $region3: #{_autoencoder_pallas.1} parent=1 // loop_header
      %s14 = sphi 0, %s18
      %p15 = scmp.ge.s32.totalorder %s14, 4
      %s24 = sphi 0, %s26
      %s27 = sphi 0, %s24
      %s28 = sphi 0, %s27
      %s44 = sphi 0, %s28
      %s48 = sphi 0, %s48
      %s50 = sphi 0, %s48
      %s51 = sphi 0, %s50
      %s65 = sphi 0, %s51
      %s69 = sphi 0, %s69
      %s71 = sphi 0, %s69
      %s72 = sphi 0, %s71
      %s86 = sphi 0, %s72
      %s90 = sphi 0, %s90
      %s92 = sphi 0, %s90
      %s93 = sphi 0, %s92
      %s107 = sphi 0, %s93
      %s111 = sphi 0, %s111
      %s113 = sphi 0, %s111
      %s114 = sphi 0, %s113
      %s128 = sphi 0, %s114
      %s134 = sphi 0, %s136
      %s137 = sphi 0, %s134
      %s138 = sphi 0, %s137
      %s154 = sphi 0, %s138
    $region4: #{_autoencoder_pallas.1} parent=1 // loop_header_branch
      %17 = sbr.rel (%p15) target = $region8
    $region5: #{_autoencoder_pallas.1} parent=1 // loop_body
      %s19 = ssub.s32 %s14, 1
      %s20 = ssub.s32 %s14, 2
      %s21 = sadd.s32 %s14, 1
      %s22 = ssub.s32 %s14, %s21
      %p23 = scmp.eq.s32.totalorder %s22, 0
      %s25 = sadd.s32 %s24, 1
      %s26 = scalar_select %p23, %s24, %s25
      %p29 = pneg %p23
      %p30 = scmp.eq.s32.totalorder %s14, 1
      %p31 = por %p29, %p30
      %p32 = scmp.ne.s32.totalorder %s24, %s27
      %p33 = scmp.eq.s32.totalorder %s14, 0
      %p34 = por %p32, %p33
      %p35 = scmp.ne.s32.totalorder %s24, %s27
      %p36 = scmp.eq.s32.totalorder %s19, 1
      %p37 = por %p35, %p36
      %p38 = scmp.ne.s32.totalorder %s27, %s28
      %p39 = scmp.eq.s32.totalorder %s19, 0
      %p40 = por %p38, %p39
      %p41 = scmp.ne.s32.totalorder %s27, %s28
      %p42 = scmp.eq.s32.totalorder %s20, 1
      %p43 = por %p41, %p42
      %p45 = scmp.ne.s32.totalorder %s28, %s44
      %p46 = scmp.eq.s32.totalorder %s20, 0
      %p47 = por %p45, %p46
      %s49 = sadd.s32 %s48, 1
      %p52 = scmp.eq.s32.totalorder %s14, 1
      %p53 = scmp.ne.s32.totalorder %s48, %s50
      %p54 = scmp.eq.s32.totalorder %s14, 0
      %p55 = por %p53, %p54
      %p56 = scmp.ne.s32.totalorder %s48, %s50
      %p57 = scmp.eq.s32.totalorder %s19, 1
      %p58 = por %p56, %p57
      %p59 = scmp.ne.s32.totalorder %s50, %s51
      %p60 = scmp.eq.s32.totalorder %s19, 0
      %p61 = por %p59, %p60
      %p62 = scmp.ne.s32.totalorder %s50, %s51
      %p63 = scmp.eq.s32.totalorder %s20, 1
      %p64 = por %p62, %p63
      %p66 = scmp.ne.s32.totalorder %s51, %s65
      %p67 = scmp.eq.s32.totalorder %s20, 0
      %p68 = por %p66, %p67
      %s70 = sadd.s32 %s69, 1
      %p73 = scmp.eq.s32.totalorder %s14, 1
      %p74 = scmp.ne.s32.totalorder %s69, %s71
      %p75 = scmp.eq.s32.totalorder %s14, 0
      %p76 = por %p74, %p75
      %p77 = scmp.ne.s32.totalorder %s69, %s71
      %p78 = scmp.eq.s32.totalorder %s19, 1
      %p79 = por %p77, %p78
      %p80 = scmp.ne.s32.totalorder %s71, %s72
      %p81 = scmp.eq.s32.totalorder %s19, 0
      %p82 = por %p80, %p81
      %p83 = scmp.ne.s32.totalorder %s71, %s72
      %p84 = scmp.eq.s32.totalorder %s20, 1
      %p85 = por %p83, %p84
      %p87 = scmp.ne.s32.totalorder %s72, %s86
      %p88 = scmp.eq.s32.totalorder %s20, 0
      %p89 = por %p87, %p88
      %s91 = sadd.s32 %s90, 1
      %p94 = scmp.eq.s32.totalorder %s14, 1
      %p95 = scmp.ne.s32.totalorder %s90, %s92
      %p96 = scmp.eq.s32.totalorder %s14, 0
      %p97 = por %p95, %p96
      %p98 = scmp.ne.s32.totalorder %s90, %s92
      %p99 = scmp.eq.s32.totalorder %s19, 1
      %p100 = por %p98, %p99
      %p101 = scmp.ne.s32.totalorder %s92, %s93
      %p102 = scmp.eq.s32.totalorder %s19, 0
      %p103 = por %p101, %p102
      %p104 = scmp.ne.s32.totalorder %s92, %s93
      %p105 = scmp.eq.s32.totalorder %s20, 1
      %p106 = por %p104, %p105
      %p108 = scmp.ne.s32.totalorder %s93, %s107
      %p109 = scmp.eq.s32.totalorder %s20, 0
      %p110 = por %p108, %p109
      %s112 = sadd.s32 %s111, 1
      %p115 = scmp.eq.s32.totalorder %s14, 1
      %p116 = scmp.ne.s32.totalorder %s111, %s113
      %p117 = scmp.eq.s32.totalorder %s14, 0
      %p118 = por %p116, %p117
      %p119 = scmp.ne.s32.totalorder %s111, %s113
      %p120 = scmp.eq.s32.totalorder %s19, 1
      %p121 = por %p119, %p120
      %p122 = scmp.ne.s32.totalorder %s113, %s114
      %p123 = scmp.eq.s32.totalorder %s19, 0
      %p124 = por %p122, %p123
      %p125 = scmp.ne.s32.totalorder %s113, %s114
      %p126 = scmp.eq.s32.totalorder %s20, 1
      %p127 = por %p125, %p126
      %p129 = scmp.ne.s32.totalorder %s114, %s128
      %p130 = scmp.eq.s32.totalorder %s20, 0
      %p131 = por %p129, %p130
      %s132 = ssub.s32 %s14, %s21
      %p133 = scmp.eq.s32.totalorder %s132, 0
      %s135 = sadd.s32 %s134, 1
      %s136 = scalar_select %p133, %s134, %s135
      %p139 = pneg %p133
      %p140 = scmp.eq.s32.totalorder %s14, 1
      %p141 = por %p139, %p140
      %p142 = scmp.ne.s32.totalorder %s134, %s137
      %p143 = scmp.eq.s32.totalorder %s14, 0
      %p144 = por %p142, %p143
      %p145 = scmp.ne.s32.totalorder %s134, %s137
      %p146 = scmp.eq.s32.totalorder %s19, 1
      %p147 = por %p145, %p146
      %p148 = scmp.ne.s32.totalorder %s137, %s138
      %p149 = scmp.eq.s32.totalorder %s19, 0
      %p150 = por %p148, %p149
      %p151 = scmp.ne.s32.totalorder %s137, %s138
      %p152 = scmp.eq.s32.totalorder %s20, 1
      %p153 = por %p151, %p152
      %p155 = scmp.ne.s32.totalorder %s138, %s154
      %p156 = scmp.eq.s32.totalorder %s20, 0
      %p157 = por %p155, %p156
      %p158 = scmp.le.s32.totalorder 1, %s14
      %p159 = scmp.lt.s32.totalorder %s14, 3
      %p160 = pnand %p158, %p159
      %p161 = pneg %p160
      // Predicated region
      $region9: #{_autoencoder_pallas.1} parent=5 // pred_check
        _
      $region10: #{_autoencoder_pallas.1} parent=5 // pred_check_branch
        %163 = sbr.rel (%p160) target = $region12
      $region11: #{_autoencoder_pallas.1} parent=5 // pred_region
        %s164 = ssub.s32 %s14, 1
        // Predicated region
        $region13: #{_autoencoder_pallas.1} parent=11 // pred_check
          %p165 = pneg %p61
        $region14: #{_autoencoder_pallas.1} parent=11 // pred_check_branch
          %167 = sbr.rel (%p165) target = $region16
        $region15: #{_autoencoder_pallas.1} parent=11 // pred_region
          _
        $region16: #{_autoencoder_pallas.1} parent=11 // pred_fallthru
          _
        // Predicated region
        $region17: #{_autoencoder_pallas.1} parent=11 // pred_check
          %p168 = pneg %p82
        $region18: #{_autoencoder_pallas.1} parent=11 // pred_check_branch
          %170 = sbr.rel (%p168) target = $region20
        $region19: #{_autoencoder_pallas.1} parent=11 // pred_region
          _
        $region20: #{_autoencoder_pallas.1} parent=11 // pred_fallthru
          _
        // Predicated region
        $region21: #{_autoencoder_pallas.1} parent=11 // pred_check
          %p171 = pneg %p103
        $region22: #{_autoencoder_pallas.1} parent=11 // pred_check_branch
          %173 = sbr.rel (%p171) target = $region24
        $region23: #{_autoencoder_pallas.1} parent=11 // pred_region
          _
        $region24: #{_autoencoder_pallas.1} parent=11 // pred_fallthru
          _
        // Predicated region
        $region25: #{_autoencoder_pallas.1} parent=11 // pred_check
          %p174 = pneg %p124
        $region26: #{_autoencoder_pallas.1} parent=11 // pred_check_branch
          %176 = sbr.rel (%p174) target = $region28
        $region27: #{_autoencoder_pallas.1} parent=11 // pred_region
          _
        $region28: #{_autoencoder_pallas.1} parent=11 // pred_fallthru
          _
      $region12: #{_autoencoder_pallas.1} parent=5 // pred_fallthru
        _
      %p177 = scmp.lt.s32.totalorder %s14, 2
      // Predicated region
      $region29: #{_autoencoder_pallas.1} parent=5 // pred_check
        %p178 = pneg %p177
      $region30: #{_autoencoder_pallas.1} parent=5 // pred_check_branch
        %180 = sbr.rel (%p178) target = $region32
      $region31: #{_autoencoder_pallas.1} parent=5 // pred_region
        // Predicated region
        $region33: #{_autoencoder_pallas.1} parent=31 // pred_check
          %p181 = pneg %p34
        $region34: #{_autoencoder_pallas.1} parent=31 // pred_check_branch
          %183 = sbr.rel (%p181) target = $region36
        $region35: #{_autoencoder_pallas.1} parent=31 // pred_region
          %p184 = scmp.lt.s32.totalorder %s14, 1
          %s185 = scalar_select %p184, %s14, 1
          %s186 = smul.addr %s185, 7
          %s187 = smul.addr %s186, 8
          %s188 = scalar_lea.vmem %s0, %s187
        $region36: #{_autoencoder_pallas.1} parent=31 // pred_fallthru
          _
      $region32: #{_autoencoder_pallas.1} parent=5 // pred_fallthru
        _
      %p189 = scmp.le.s32.totalorder 1, %s14
      %p190 = scmp.lt.s32.totalorder %s14, 3
      %p191 = pnand %p189, %p190
      %p192 = pneg %p191
      // Predicated region
      $region37: #{_autoencoder_pallas.1} parent=5 // pred_check
        _
      $region38: #{_autoencoder_pallas.1} parent=5 // pred_check_branch
        %194 = sbr.rel (%p191) target = $region40
      $region39: #{_autoencoder_pallas.1} parent=5 // pred_region
        %s195 = ssub.s32 %s14, 1
        %p196 = scmp.lt.s32.totalorder %s19, 1
        %s197 = scalar_select %p196, %s19, 1
        %s198 = smul.addr %s197, 7
        %s199 = smul.addr %s198, 8
        %s200 = scalar_lea.vmem %s0, %s199
        %p201 = pneg %p40
        %p202 = pneg %p37
        %p203 = pneg %p61
        %p204 = pneg %p58
        %p205 = pneg %p82
        %p206 = pneg %p79
        %p207 = pneg %p103
        %p208 = pneg %p100
        %p209 = pneg %p124
        %p210 = pneg %p121
        %p211 = pneg %p150
        %p212 = pneg %p147
        %s213 = sand.u32 %s137, 1
        %s214 = scalar_lea.sflag [#allocation3], %s213
        %s215 = sand.u32 %s137, 1
        %s216 = smul.addr %s215, 56
        %s217 = scalar_lea.vmem [#allocation2], %s216
        %p218 = scmp.lt.s32.totalorder %s19, 1
        %s219 = scalar_select %p218, %s19, 1
        %s220 = smul.addr %s219, 7
        %s221 = smul.addr %s220, 8
        %s222 = scalar_lea.vmem %s0, %s221
        %v223 = vld [vmem:[%s222] sm:$0xff]
        %v224 = vld [vmem:[%s222 + $0x8] sm:$0xff]
        %v225 = vld [vmem:[%s222 + $0x10] sm:$0xff]
        %v226 = vld [vmem:[%s222 + $0x18] sm:$0xff]
        %v227 = vld [vmem:[%s222 + $0x20] sm:$0xff]
        %v228 = vld [vmem:[%s222 + $0x28] sm:$0xff]
        %v229 = vld [vmem:[%s222 + $0x30] sm:$0xff]
        %v230 = vld [vmem:[%s1] sm:$0xff]
        %v231 = vld [vmem:[%s1 + $0x8] sm:$0xff]
        %v232 = vld [vmem:[%s1 + $0x10] sm:$0xff]
        %v233 = vld [vmem:[%s1 + $0x18] sm:$0xff]
        %v234 = vld [vmem:[%s1 + $0x20] sm:$0xff]
        %v235 = vld [vmem:[%s1 + $0x28] sm:$0xff]
        %v236 = vld [vmem:[%s1 + $0x30] sm:$0xff]
        %v237 = vld [vmem:[%s1 + $0x38] sm:$0xff]
        %v238 = vld [vmem:[%s1 + $0x40] sm:$0xff]
        %v239 = vld [vmem:[%s1 + $0x48] sm:$0xff]
        %v240 = vld [vmem:[%s1 + $0x50] sm:$0xff]
        %v241 = vld [vmem:[%s1 + $0x58] sm:$0xff]
        %v242 = vld [vmem:[%s1 + $0x60] sm:$0xff]
        %v243 = vld [vmem:[%s1 + $0x68] sm:$0xff]
        %v244 = vld [vmem:[%s1 + $0x70] sm:$0xff]
        %v245 = vld [vmem:[%s1 + $0x78] sm:$0xff]
        %v246 = vld [vmem:[%s1 + $0x80] sm:$0xff]
        %v247 = vld [vmem:[%s1 + $0x88] sm:$0xff]
        %v248 = vld [vmem:[%s1 + $0x90] sm:$0xff]
        %v249 = vld [vmem:[%s1 + $0x98] sm:$0xff]
        %v250 = vld [vmem:[%s1 + $0xa0] sm:$0xff]
        %v251 = vld [vmem:[%s1 + $0xa8] sm:$0xff]
        %v252 = vld [vmem:[%s1 + $0xb0] sm:$0xff]
        %v253 = vld [vmem:[%s1 + $0xb8] sm:$0xff]
        %v254 = vld [vmem:[%s1 + $0xc0] sm:$0xff]
        %v255 = vld [vmem:[%s1 + $0xc8] sm:$0xff]
        %v256 = vld [vmem:[%s1 + $0xd0] sm:$0xff]
        %v257 = vld [vmem:[%s1 + $0xd8] sm:$0xff]
        %v258 = vld [vmem:[%s1 + $0xe0] sm:$0xff]
        %v259 = vld [vmem:[%s1 + $0xe8] sm:$0xff]
        %v260 = vld [vmem:[%s1 + $0xf0] sm:$0xff]
        %v261 = vld [vmem:[%s1 + $0xf8] sm:$0xff]
        %v262 = vld [vmem:[%s1 + $0x100] sm:$0xff]
        %v263 = vld [vmem:[%s1 + $0x108] sm:$0xff]
        %v264 = vld [vmem:[%s1 + $0x110] sm:$0xff]
        %v265 = vld [vmem:[%s1 + $0x118] sm:$0xff]
        %v266 = vld [vmem:[%s1 + $0x120] sm:$0xff]
        %v267 = vld [vmem:[%s1 + $0x128] sm:$0xff]
        %v268 = vld [vmem:[%s1 + $0x130] sm:$0xff]
        %v269 = vld [vmem:[%s1 + $0x138] sm:$0xff]
        %v270 = vld [vmem:[%s1 + $0x140] sm:$0xff]
        %v271 = vld [vmem:[%s1 + $0x148] sm:$0xff]
        %v272 = vld [vmem:[%s1 + $0x150] sm:$0xff]
        %v273 = vld [vmem:[%s1 + $0x158] sm:$0xff]
        %v274 = vld [vmem:[%s1 + $0x160] sm:$0xff]
        %v275 = vld [vmem:[%s1 + $0x168] sm:$0xff]
        %v276 = vld [vmem:[%s1 + $0x170] sm:$0xff]
        %v277 = vld [vmem:[%s1 + $0x178] sm:$0xff]
        %v278 = vld [vmem:[%s1 + $0x180] sm:$0xff]
        %v279 = vld [vmem:[%s1 + $0x188] sm:$0xff]
        %v280 = vld [vmem:[%s1 + $0x190] sm:$0xff]
        %v281 = vld [vmem:[%s1 + $0x198] sm:$0xff]
        %v282 = vld [vmem:[%s1 + $0x1a0] sm:$0xff]
        %v283 = vld [vmem:[%s1 + $0x1a8] sm:$0xff]
        %v284 = vld [vmem:[%s1 + $0x1b0] sm:$0xff]
        %v285 = vld [vmem:[%s1 + $0x1b8] sm:$0xff]
        %v286 = vld [vmem:[%s1 + $0x1c0] sm:$0xff]
        %v287 = vld [vmem:[%s1 + $0x1c8] sm:$0xff]
        %v288 = vld [vmem:[%s1 + $0x1d0] sm:$0xff]
        %v289 = vld [vmem:[%s1 + $0x1d8] sm:$0xff]
        %v290 = vld [vmem:[%s1 + $0x1e0] sm:$0xff]
        %v291 = vld [vmem:[%s1 + $0x1e8] sm:$0xff]
        %v292 = vld [vmem:[%s1 + $0x1f0] sm:$0xff]
        %v293 = vld [vmem:[%s1 + $0x1f8] sm:$0xff]
        %v294 = vld [vmem:[%s1 + $0x200] sm:$0xff]
        %v295 = vld [vmem:[%s1 + $0x208] sm:$0xff]
        %v296 = vld [vmem:[%s1 + $0x210] sm:$0xff]
        %v297 = vld [vmem:[%s1 + $0x218] sm:$0xff]
        %v298 = vld [vmem:[%s1 + $0x220] sm:$0xff]
        %v299 = vld [vmem:[%s1 + $0x228] sm:$0xff]
        %v300 = vld [vmem:[%s1 + $0x230] sm:$0xff]
        %v301 = vld [vmem:[%s1 + $0x238] sm:$0xff]
        %v302 = vld [vmem:[%s1 + $0x240] sm:$0xff]
        %v303 = vld [vmem:[%s1 + $0x248] sm:$0xff]
        %v304 = vld [vmem:[%s1 + $0x250] sm:$0xff]
        %v305 = vld [vmem:[%s1 + $0x258] sm:$0xff]
        %v306 = vld [vmem:[%s1 + $0x260] sm:$0xff]
        %v307 = vld [vmem:[%s1 + $0x268] sm:$0xff]
        %v308 = vld [vmem:[%s1 + $0x270] sm:$0xff]
        %v309 = vld [vmem:[%s1 + $0x278] sm:$0xff]
        %v310 = vld [vmem:[%s1 + $0x280] sm:$0xff]
        %v311 = vld [vmem:[%s1 + $0x288] sm:$0xff]
        %v312 = vld [vmem:[%s1 + $0x290] sm:$0xff]
        %v313 = vld [vmem:[%s1 + $0x298] sm:$0xff]
        %v314 = vld [vmem:[%s1 + $0x2a0] sm:$0xff]
        %v315 = vld [vmem:[%s1 + $0x2a8] sm:$0xff]
        %v316 = vld [vmem:[%s1 + $0x2b0] sm:$0xff]
        %v317 = vld [vmem:[%s1 + $0x2b8] sm:$0xff]
        %v318 = vld [vmem:[%s1 + $0x2c0] sm:$0xff]
        %v319 = vld [vmem:[%s1 + $0x2c8] sm:$0xff]
        %v320 = vld [vmem:[%s1 + $0x2d0] sm:$0xff]
        %v321 = vld [vmem:[%s1 + $0x2d8] sm:$0xff]
        %v322 = vld [vmem:[%s1 + $0x2e0] sm:$0xff]
        %v323 = vld [vmem:[%s1 + $0x2e8] sm:$0xff]
        %v324 = vld [vmem:[%s1 + $0x2f0] sm:$0xff]
        %v325 = vld [vmem:[%s1 + $0x2f8] sm:$0xff]
        %v326 = vld [vmem:[%s1 + $0x300] sm:$0xff]
        %v327 = vld [vmem:[%s1 + $0x308] sm:$0xff]
        %v328 = vld [vmem:[%s2] sm:$0x1]
        %v330 = vperm.slane %v328, 0
        %vm332 = vcmask 130048
        %v334 = vsel %vm332, %v229, 0
        %336 = vmatpush.msra.mxu0 %v245
        %337 = vmatpush.msra.mxu0 %v244
        %338 = vmatpush.msra.mxu0 %v243
        %339 = vmatpush.msra.mxu0 %v242
        %340 = vmatpush.msra.mxu0 %v241
        %341 = vmatpush.msra.mxu0 %v240
        %342 = vmatpush.msra.mxu0 %v239
        %343 = vmatpush.msra.mxu0 %v238
        %344 = vmatpush.msra.mxu0 %v237
        %345 = vmatpush.msra.mxu0 %v236
        %346 = vmatpush.msra.mxu0 %v235
        %347 = vmatpush.msra.mxu0 %v234
        %348 = vmatpush.msra.mxu0 %v233
        %349 = vmatpush.msra.mxu0 %v232
        %350 = vmatpush.msra.mxu0 %v231
        %351 = vmatpush.msra.mxu0 %v230
        %352 = vmatmul.f32.gmra.mxu0 %v223
        %v353 = vpop.f32.mrf.mxu0
        %v354 = vadd.f32 %v330, %v353
        %355 = vdwg.mxu0
        %356 = vmatpush.msra.mxu0 %v261
        %357 = vmatpush.msra.mxu0 %v260
        %358 = vmatpush.msra.mxu0 %v259
        %359 = vmatpush.msra.mxu0 %v258
        %360 = vmatpush.msra.mxu0 %v257
        %361 = vmatpush.msra.mxu0 %v256
        %362 = vmatpush.msra.mxu0 %v255
        %363 = vmatpush.msra.mxu0 %v254
        %364 = vmatpush.msra.mxu0 %v253
        %365 = vmatpush.msra.mxu0 %v252
        %366 = vmatpush.msra.mxu0 %v251
        %367 = vmatpush.msra.mxu0 %v250
        %368 = vmatpush.msra.mxu0 %v249
        %369 = vmatpush.msra.mxu0 %v248
        %370 = vmatpush.msra.mxu0 %v247
        %371 = vmatpush.msra.mxu0 %v246
        %372 = vmatmul.f32.gmra.mxu0 %v224
        %v373 = vpop.f32.mrf.mxu0
        %v374 = vadd.f32 %v354, %v373
        %375 = vdwg.mxu0
        %376 = vmatpush.msra.mxu0 %v277
        %377 = vmatpush.msra.mxu0 %v276
        %378 = vmatpush.msra.mxu0 %v275
        %379 = vmatpush.msra.mxu0 %v274
        %380 = vmatpush.msra.mxu0 %v273
        %381 = vmatpush.msra.mxu0 %v272
        %382 = vmatpush.msra.mxu0 %v271
        %383 = vmatpush.msra.mxu0 %v270
        %384 = vmatpush.msra.mxu0 %v269
        %385 = vmatpush.msra.mxu0 %v268
        %386 = vmatpush.msra.mxu0 %v267
        %387 = vmatpush.msra.mxu0 %v266
        %388 = vmatpush.msra.mxu0 %v265
        %389 = vmatpush.msra.mxu0 %v264
        %390 = vmatpush.msra.mxu0 %v263
        %391 = vmatpush.msra.mxu0 %v262
        %392 = vmatmul.f32.gmra.mxu0 %v225
        %v393 = vpop.f32.mrf.mxu0
        %v394 = vadd.f32 %v374, %v393
        %395 = vdwg.mxu0
        %396 = vmatpush.msra.mxu0 %v293
        %397 = vmatpush.msra.mxu0 %v292
        %398 = vmatpush.msra.mxu0 %v291
        %399 = vmatpush.msra.mxu0 %v290
        %400 = vmatpush.msra.mxu0 %v289
        %401 = vmatpush.msra.mxu0 %v288
        %402 = vmatpush.msra.mxu0 %v287
        %403 = vmatpush.msra.mxu0 %v286
        %404 = vmatpush.msra.mxu0 %v285
        %405 = vmatpush.msra.mxu0 %v284
        %406 = vmatpush.msra.mxu0 %v283
        %407 = vmatpush.msra.mxu0 %v282
        %408 = vmatpush.msra.mxu0 %v281
        %409 = vmatpush.msra.mxu0 %v280
        %410 = vmatpush.msra.mxu0 %v279
        %411 = vmatpush.msra.mxu0 %v278
        %412 = vmatmul.f32.gmra.mxu0 %v226
        %v413 = vpop.f32.mrf.mxu0
        %v414 = vadd.f32 %v394, %v413
        %415 = vdwg.mxu0
        %416 = vmatpush.msra.mxu0 %v309
        %417 = vmatpush.msra.mxu0 %v308
        %418 = vmatpush.msra.mxu0 %v307
        %419 = vmatpush.msra.mxu0 %v306
        %420 = vmatpush.msra.mxu0 %v305
        %421 = vmatpush.msra.mxu0 %v304
        %422 = vmatpush.msra.mxu0 %v303
        %423 = vmatpush.msra.mxu0 %v302
        %424 = vmatpush.msra.mxu0 %v301
        %425 = vmatpush.msra.mxu0 %v300
        %426 = vmatpush.msra.mxu0 %v299
        %427 = vmatpush.msra.mxu0 %v298
        %428 = vmatpush.msra.mxu0 %v297
        %429 = vmatpush.msra.mxu0 %v296
        %430 = vmatpush.msra.mxu0 %v295
        %431 = vmatpush.msra.mxu0 %v294
        %432 = vmatmul.f32.gmra.mxu0 %v227
        %v433 = vpop.f32.mrf.mxu0
        %v434 = vadd.f32 %v414, %v433
        %435 = vdwg.mxu0
        %436 = vmatpush.msra.mxu0 %v325
        %437 = vmatpush.msra.mxu0 %v324
        %438 = vmatpush.msra.mxu0 %v323
        %439 = vmatpush.msra.mxu0 %v322
        %440 = vmatpush.msra.mxu0 %v321
        %441 = vmatpush.msra.mxu0 %v320
        %442 = vmatpush.msra.mxu0 %v319
        %443 = vmatpush.msra.mxu0 %v318
        %444 = vmatpush.msra.mxu0 %v317
        %445 = vmatpush.msra.mxu0 %v316
        %446 = vmatpush.msra.mxu0 %v315
        %447 = vmatpush.msra.mxu0 %v314
        %448 = vmatpush.msra.mxu0 %v313
        %449 = vmatpush.msra.mxu0 %v312
        %450 = vmatpush.msra.mxu0 %v311
        %451 = vmatpush.msra.mxu0 %v310
        %452 = vmatmul.f32.gmra.mxu0 %v228
        %v453 = vpop.f32.mrf.mxu0
        %v454 = vadd.f32 %v434, %v453
        %455 = vdwg.mxu0
        %456 = vmatpush.msra.mxu0 0.0
        %457 = vmatpush.msra.mxu0 0.0
        %458 = vmatpush.msra.mxu0 0.0
        %459 = vmatpush.msra.mxu0 0.0
        %460 = vmatpush.msra.mxu0 0.0
        %461 = vmatpush.msra.mxu0 0.0
        %462 = vmatpush.msra.mxu0 0.0
        %463 = vmatpush.msra.mxu0 0.0
        %464 = vmatpush.msra.mxu0 0.0
        %465 = vmatpush.msra.mxu0 0.0
        %466 = vmatpush.msra.mxu0 0.0
        %467 = vmatpush.msra.mxu0 0.0
        %468 = vmatpush.msra.mxu0 0.0
        %469 = vmatpush.msra.mxu0 0.0
        %470 = vmatpush.msra.mxu0 %v327
        %471 = vmatpush.msra.mxu0 %v326
        %472 = vmatmul.f32.gmra.mxu0 %v334
        %v473 = vpop.f32.mrf.mxu0
        %v474 = vadd.f32 %v454, %v473
        %475 = vdwg.mxu0
        %v476 = vmax.f32 %v474, 0.0
        %v477 = vld [vmem:[%s3] sm:$0xff]
        %v478 = vld [vmem:[%s3 + $0x8] sm:$0xff]
        %v479 = vld [vmem:[%s3 + $0x10] sm:$0xff]
        %v480 = vld [vmem:[%s3 + $0x18] sm:$0xff]
        %v481 = vld [vmem:[%s3 + $0x20] sm:$0xff]
        %v482 = vld [vmem:[%s3 + $0x28] sm:$0xff]
        %v483 = vld [vmem:[%s3 + $0x30] sm:$0xff]
        %v484 = vld [vmem:[%s3 + $0x38] sm:$0xff]
        %v485 = vld [vmem:[%s3 + $0x40] sm:$0xff]
        %v486 = vld [vmem:[%s3 + $0x48] sm:$0xff]
        %v487 = vld [vmem:[%s3 + $0x50] sm:$0xff]
        %v488 = vld [vmem:[%s3 + $0x58] sm:$0xff]
        %v489 = vld [vmem:[%s3 + $0x60] sm:$0xff]
        %v490 = vld [vmem:[%s3 + $0x68] sm:$0xff]
        %v491 = vld [vmem:[%s3 + $0x70] sm:$0xff]
        %v492 = vld [vmem:[%s3 + $0x78] sm:$0xff]
        %v493 = vld [vmem:[%s3 + $0x80] sm:$0xff]
        %v494 = vld [vmem:[%s3 + $0x88] sm:$0xff]
        %v495 = vld [vmem:[%s3 + $0x90] sm:$0xff]
        %v496 = vld [vmem:[%s3 + $0x98] sm:$0xff]
        %v497 = vld [vmem:[%s3 + $0xa0] sm:$0xff]
        %v498 = vld [vmem:[%s3 + $0xa8] sm:$0xff]
        %v499 = vld [vmem:[%s3 + $0xb0] sm:$0xff]
        %v500 = vld [vmem:[%s3 + $0xb8] sm:$0xff]
        %v501 = vld [vmem:[%s3 + $0xc0] sm:$0xff]
        %v502 = vld [vmem:[%s3 + $0xc8] sm:$0xff]
        %v503 = vld [vmem:[%s3 + $0xd0] sm:$0xff]
        %v504 = vld [vmem:[%s3 + $0xd8] sm:$0xff]
        %v505 = vld [vmem:[%s3 + $0xe0] sm:$0xff]
        %v506 = vld [vmem:[%s3 + $0xe8] sm:$0xff]
        %v507 = vld [vmem:[%s3 + $0xf0] sm:$0xff]
        %v508 = vld [vmem:[%s3 + $0xf8] sm:$0xff]
        %v509 = vld [vmem:[%s3 + $0x100] sm:$0xff]
        %v510 = vld [vmem:[%s3 + $0x108] sm:$0xff]
        %v511 = vld [vmem:[%s3 + $0x110] sm:$0xff]
        %v512 = vld [vmem:[%s3 + $0x118] sm:$0xff]
        %v513 = vld [vmem:[%s3 + $0x120] sm:$0xff]
        %v514 = vld [vmem:[%s3 + $0x128] sm:$0xff]
        %v515 = vld [vmem:[%s3 + $0x130] sm:$0xff]
        %v516 = vld [vmem:[%s3 + $0x138] sm:$0xff]
        %v517 = vld [vmem:[%s3 + $0x140] sm:$0xff]
        %v518 = vld [vmem:[%s3 + $0x148] sm:$0xff]
        %v519 = vld [vmem:[%s3 + $0x150] sm:$0xff]
        %v520 = vld [vmem:[%s3 + $0x158] sm:$0xff]
        %v521 = vld [vmem:[%s3 + $0x160] sm:$0xff]
        %v522 = vld [vmem:[%s3 + $0x168] sm:$0xff]
        %v523 = vld [vmem:[%s3 + $0x170] sm:$0xff]
        %v524 = vld [vmem:[%s3 + $0x178] sm:$0xff]
        %v525 = vld [vmem:[%s3 + $0x180] sm:$0xff]
        %v526 = vld [vmem:[%s3 + $0x188] sm:$0xff]
        %v527 = vld [vmem:[%s3 + $0x190] sm:$0xff]
        %v528 = vld [vmem:[%s3 + $0x198] sm:$0xff]
        %v529 = vld [vmem:[%s3 + $0x1a0] sm:$0xff]
        %v530 = vld [vmem:[%s3 + $0x1a8] sm:$0xff]
        %v531 = vld [vmem:[%s3 + $0x1b0] sm:$0xff]
        %v532 = vld [vmem:[%s3 + $0x1b8] sm:$0xff]
        %v533 = vld [vmem:[%s3 + $0x1c0] sm:$0xff]
        %v534 = vld [vmem:[%s3 + $0x1c8] sm:$0xff]
        %v535 = vld [vmem:[%s3 + $0x1d0] sm:$0xff]
        %v536 = vld [vmem:[%s3 + $0x1d8] sm:$0xff]
        %v537 = vld [vmem:[%s3 + $0x1e0] sm:$0xff]
        %v538 = vld [vmem:[%s3 + $0x1e8] sm:$0xff]
        %v539 = vld [vmem:[%s3 + $0x1f0] sm:$0xff]
        %v540 = vld [vmem:[%s3 + $0x1f8] sm:$0xff]
        %v541 = vld [vmem:[%s3 + $0x200] sm:$0xff]
        %v542 = vld [vmem:[%s3 + $0x208] sm:$0xff]
        %v543 = vld [vmem:[%s3 + $0x210] sm:$0xff]
        %v544 = vld [vmem:[%s3 + $0x218] sm:$0xff]
        %v545 = vld [vmem:[%s3 + $0x220] sm:$0xff]
        %v546 = vld [vmem:[%s3 + $0x228] sm:$0xff]
        %v547 = vld [vmem:[%s3 + $0x230] sm:$0xff]
        %v548 = vld [vmem:[%s3 + $0x238] sm:$0xff]
        %v549 = vld [vmem:[%s3 + $0x240] sm:$0xff]
        %v550 = vld [vmem:[%s3 + $0x248] sm:$0xff]
        %v551 = vld [vmem:[%s3 + $0x250] sm:$0xff]
        %v552 = vld [vmem:[%s3 + $0x258] sm:$0xff]
        %v553 = vld [vmem:[%s3 + $0x260] sm:$0xff]
        %v554 = vld [vmem:[%s3 + $0x268] sm:$0xff]
        %v555 = vld [vmem:[%s3 + $0x270] sm:$0xff]
        %v556 = vld [vmem:[%s3 + $0x278] sm:$0xff]
        %v557 = vld [vmem:[%s3 + $0x280] sm:$0xff]
        %v558 = vld [vmem:[%s3 + $0x288] sm:$0xff]
        %v559 = vld [vmem:[%s3 + $0x290] sm:$0xff]
        %v560 = vld [vmem:[%s3 + $0x298] sm:$0xff]
        %v561 = vld [vmem:[%s3 + $0x2a0] sm:$0xff]
        %v562 = vld [vmem:[%s3 + $0x2a8] sm:$0xff]
        %v563 = vld [vmem:[%s3 + $0x2b0] sm:$0xff]
        %v564 = vld [vmem:[%s3 + $0x2b8] sm:$0xff]
        %v565 = vld [vmem:[%s3 + $0x2c0] sm:$0xff]
        %v566 = vld [vmem:[%s3 + $0x2c8] sm:$0xff]
        %v567 = vld [vmem:[%s3 + $0x2d0] sm:$0xff]
        %v568 = vld [vmem:[%s3 + $0x2d8] sm:$0xff]
        %v569 = vld [vmem:[%s3 + $0x2e0] sm:$0xff]
        %v570 = vld [vmem:[%s3 + $0x2e8] sm:$0xff]
        %v571 = vld [vmem:[%s3 + $0x2f0] sm:$0xff]
        %v572 = vld [vmem:[%s3 + $0x2f8] sm:$0xff]
        %v573 = vld [vmem:[%s3 + $0x300] sm:$0xff]
        %v574 = vld [vmem:[%s3 + $0x308] sm:$0xff]
        %v575 = vld [vmem:[%s3 + $0x310] sm:$0xff]
        %v576 = vld [vmem:[%s3 + $0x318] sm:$0xff]
        %v577 = vld [vmem:[%s3 + $0x320] sm:$0xff]
        %v578 = vld [vmem:[%s3 + $0x328] sm:$0xff]
        %v579 = vld [vmem:[%s3 + $0x330] sm:$0xff]
        %v580 = vld [vmem:[%s3 + $0x338] sm:$0xff]
        %v581 = vld [vmem:[%s3 + $0x340] sm:$0xff]
        %v582 = vld [vmem:[%s3 + $0x348] sm:$0xff]
        %v583 = vld [vmem:[%s3 + $0x350] sm:$0xff]
        %v584 = vld [vmem:[%s3 + $0x358] sm:$0xff]
        %v585 = vld [vmem:[%s3 + $0x360] sm:$0xff]
        %v586 = vld [vmem:[%s3 + $0x368] sm:$0xff]
        %v587 = vld [vmem:[%s3 + $0x370] sm:$0xff]
        %v588 = vld [vmem:[%s3 + $0x378] sm:$0xff]
        %v589 = vld [vmem:[%s4] sm:$0x7f]
        %v591 = vperm.slane %v589, 0
        %v592 = vperm.slane %v589, 1
        %v593 = vperm.slane %v589, 2
        %v594 = vperm.slane %v589, 3
        %v595 = vperm.slane %v589, 4
        %v596 = vperm.slane %v589, 5
        %v597 = vperm.slane %v589, 6
        %605 = vmatpush.msra.mxu0 %v582
        %606 = vmatpush.msra.mxu0 %v575
        %607 = vmatpush.msra.mxu0 %v568
        %608 = vmatpush.msra.mxu0 %v561
        %609 = vmatpush.msra.mxu0 %v554
        %610 = vmatpush.msra.mxu0 %v547
        %611 = vmatpush.msra.mxu0 %v540
        %612 = vmatpush.msra.mxu0 %v533
        %613 = vmatpush.msra.mxu0 %v526
        %614 = vmatpush.msra.mxu0 %v519
        %615 = vmatpush.msra.mxu0 %v512
        %616 = vmatpush.msra.mxu0 %v505
        %617 = vmatpush.msra.mxu0 %v498
        %618 = vmatpush.msra.mxu0 %v491
        %619 = vmatpush.msra.mxu0 %v484
        %620 = vmatpush.msra.mxu0 %v477
        %621 = vmatmul.f32.gmra.mxu0 %v476
        %v622 = vpop.f32.mrf.mxu0
        %v623 = vadd.f32 %v591, %v622
        %624 = vdwg.mxu0
        %625 = vmatpush.msra.mxu0 %v583
        %626 = vmatpush.msra.mxu0 %v576
        %627 = vmatpush.msra.mxu0 %v569
        %628 = vmatpush.msra.mxu0 %v562
        %629 = vmatpush.msra.mxu0 %v555
        %630 = vmatpush.msra.mxu0 %v548
        %631 = vmatpush.msra.mxu0 %v541
        %632 = vmatpush.msra.mxu0 %v534
        %633 = vmatpush.msra.mxu0 %v527
        %634 = vmatpush.msra.mxu0 %v520
        %635 = vmatpush.msra.mxu0 %v513
        %636 = vmatpush.msra.mxu0 %v506
        %637 = vmatpush.msra.mxu0 %v499
        %638 = vmatpush.msra.mxu0 %v492
        %639 = vmatpush.msra.mxu0 %v485
        %640 = vmatpush.msra.mxu0 %v478
        %641 = vmatmul.f32.gmra.mxu0 %v476
        %v642 = vpop.f32.mrf.mxu0
        %v643 = vadd.f32 %v592, %v642
        %644 = vdwg.mxu0
        %645 = vmatpush.msra.mxu0 %v584
        %646 = vmatpush.msra.mxu0 %v577
        %647 = vmatpush.msra.mxu0 %v570
        %648 = vmatpush.msra.mxu0 %v563
        %649 = vmatpush.msra.mxu0 %v556
        %650 = vmatpush.msra.mxu0 %v549
        %651 = vmatpush.msra.mxu0 %v542
        %652 = vmatpush.msra.mxu0 %v535
        %653 = vmatpush.msra.mxu0 %v528
        %654 = vmatpush.msra.mxu0 %v521
        %655 = vmatpush.msra.mxu0 %v514
        %656 = vmatpush.msra.mxu0 %v507
        %657 = vmatpush.msra.mxu0 %v500
        %658 = vmatpush.msra.mxu0 %v493
        %659 = vmatpush.msra.mxu0 %v486
        %660 = vmatpush.msra.mxu0 %v479
        %661 = vmatmul.f32.gmra.mxu0 %v476
        %v662 = vpop.f32.mrf.mxu0
        %v663 = vadd.f32 %v593, %v662
        %664 = vdwg.mxu0
        %665 = vmatpush.msra.mxu0 %v585
        %666 = vmatpush.msra.mxu0 %v578
        %667 = vmatpush.msra.mxu0 %v571
        %668 = vmatpush.msra.mxu0 %v564
        %669 = vmatpush.msra.mxu0 %v557
        %670 = vmatpush.msra.mxu0 %v550
        %671 = vmatpush.msra.mxu0 %v543
        %672 = vmatpush.msra.mxu0 %v536
        %673 = vmatpush.msra.mxu0 %v529
        %674 = vmatpush.msra.mxu0 %v522
        %675 = vmatpush.msra.mxu0 %v515
        %676 = vmatpush.msra.mxu0 %v508
        %677 = vmatpush.msra.mxu0 %v501
        %678 = vmatpush.msra.mxu0 %v494
        %679 = vmatpush.msra.mxu0 %v487
        %680 = vmatpush.msra.mxu0 %v480
        %681 = vmatmul.f32.gmra.mxu0 %v476
        %v682 = vpop.f32.mrf.mxu0
        %v683 = vadd.f32 %v594, %v682
        %684 = vdwg.mxu0
        %685 = vmatpush.msra.mxu0 %v586
        %686 = vmatpush.msra.mxu0 %v579
        %687 = vmatpush.msra.mxu0 %v572
        %688 = vmatpush.msra.mxu0 %v565
        %689 = vmatpush.msra.mxu0 %v558
        %690 = vmatpush.msra.mxu0 %v551
        %691 = vmatpush.msra.mxu0 %v544
        %692 = vmatpush.msra.mxu0 %v537
        %693 = vmatpush.msra.mxu0 %v530
        %694 = vmatpush.msra.mxu0 %v523
        %695 = vmatpush.msra.mxu0 %v516
        %696 = vmatpush.msra.mxu0 %v509
        %697 = vmatpush.msra.mxu0 %v502
        %698 = vmatpush.msra.mxu0 %v495
        %699 = vmatpush.msra.mxu0 %v488
        %700 = vmatpush.msra.mxu0 %v481
        %701 = vmatmul.f32.gmra.mxu0 %v476
        %v702 = vpop.f32.mrf.mxu0
        %v703 = vadd.f32 %v595, %v702
        %704 = vdwg.mxu0
        %705 = vmatpush.msra.mxu0 %v587
        %706 = vmatpush.msra.mxu0 %v580
        %707 = vmatpush.msra.mxu0 %v573
        %708 = vmatpush.msra.mxu0 %v566
        %709 = vmatpush.msra.mxu0 %v559
        %710 = vmatpush.msra.mxu0 %v552
        %711 = vmatpush.msra.mxu0 %v545
        %712 = vmatpush.msra.mxu0 %v538
        %713 = vmatpush.msra.mxu0 %v531
        %714 = vmatpush.msra.mxu0 %v524
        %715 = vmatpush.msra.mxu0 %v517
        %716 = vmatpush.msra.mxu0 %v510
        %717 = vmatpush.msra.mxu0 %v503
        %718 = vmatpush.msra.mxu0 %v496
        %719 = vmatpush.msra.mxu0 %v489
        %720 = vmatpush.msra.mxu0 %v482
        %721 = vmatmul.f32.gmra.mxu0 %v476
        %v722 = vpop.f32.mrf.mxu0
        %v723 = vadd.f32 %v596, %v722
        %724 = vdwg.mxu0
        %725 = vmatpush.msra.mxu0 %v588
        %726 = vmatpush.msra.mxu0 %v581
        %727 = vmatpush.msra.mxu0 %v574
        %728 = vmatpush.msra.mxu0 %v567
        %729 = vmatpush.msra.mxu0 %v560
        %730 = vmatpush.msra.mxu0 %v553
        %731 = vmatpush.msra.mxu0 %v546
        %732 = vmatpush.msra.mxu0 %v539
        %733 = vmatpush.msra.mxu0 %v532
        %734 = vmatpush.msra.mxu0 %v525
        %735 = vmatpush.msra.mxu0 %v518
        %736 = vmatpush.msra.mxu0 %v511
        %737 = vmatpush.msra.mxu0 %v504
        %738 = vmatpush.msra.mxu0 %v497
        %739 = vmatpush.msra.mxu0 %v490
        %740 = vmatpush.msra.mxu0 %v483
        %741 = vmatmul.f32.gmra.mxu0 %v476
        %v742 = vpop.f32.mrf.mxu0
        %v743 = vadd.f32 %v597, %v742
        %744 = vdwg.mxu0
        %v745 = vxor.u32 %v623, 2147483648
        %v746 = vxor.u32 %v643, 2147483648
        %v747 = vxor.u32 %v663, 2147483648
        %v748 = vxor.u32 %v683, 2147483648
        %v749 = vxor.u32 %v703, 2147483648
        %v750 = vxor.u32 %v723, 2147483648
        %v751 = vxor.u32 %v743, 2147483648
        %v752 = vmul.f32 %v745, 1.442695
        %v753 = vpow.pop %v752
        %v754 = vmul.f32 %v746, 1.442695
        %v755 = vpow.pop %v754
        %v756 = vmul.f32 %v747, 1.442695
        %v757 = vpow.pop %v756
        %v758 = vmul.f32 %v748, 1.442695
        %v759 = vpow.pop %v758
        %v760 = vmul.f32 %v749, 1.442695
        %v761 = vpow.pop %v760
        %v762 = vmul.f32 %v750, 1.442695
        %v763 = vpow.pop %v762
        %v764 = vmul.f32 %v751, 1.442695
        %v765 = vpow.pop %v764
        %v766 = vadd.f32 %v753, 1.0
        %v767 = vadd.f32 %v755, 1.0
        %v768 = vadd.f32 %v757, 1.0
        %v769 = vadd.f32 %v759, 1.0
        %v770 = vadd.f32 %v761, 1.0
        %v771 = vadd.f32 %v763, 1.0
        %v772 = vadd.f32 %v765, 1.0
        %v773 = vrcp.pop %v766
        %v774 = vmul.f32 %v766, %v773
        %v775 = vsub.f32 1.0, %v774
        %v776 = vmul.f32 %v773, %v775
        %v777 = vadd.f32 %v773, %v776
        %vm778 = vweird.f32 %v766
        %vm779 = vweird.f32 %v773
        %vm780 = vmor %vm778, %vm779
        %v781 = vsel %vm780, %v773, %v777
        %v782 = vand.u32 2147483647, %v766
        %vm783 = vcmp.eq.f32.partialorder %v782, 8.507059e+37
        %v784 = vand.u32 %v766, 2147483648
        %v785 = vor.u32 1.1754944e-38, %v784
        %v786 = vsel %vm783, %v785, %v781
        %v787 = vmul.f32 1.0, %v786
        %v788 = vrcp.pop %v767
        %v789 = vmul.f32 %v767, %v788
        %v790 = vsub.f32 1.0, %v789
        %v791 = vmul.f32 %v788, %v790
        %v792 = vadd.f32 %v788, %v791
        %vm793 = vweird.f32 %v767
        %vm794 = vweird.f32 %v788
        %vm795 = vmor %vm793, %vm794
        %v796 = vsel %vm795, %v788, %v792
        %v797 = vand.u32 2147483647, %v767
        %vm798 = vcmp.eq.f32.partialorder %v797, 8.507059e+37
        %v799 = vand.u32 %v767, 2147483648
        %v800 = vor.u32 1.1754944e-38, %v799
        %v801 = vsel %vm798, %v800, %v796
        %v802 = vmul.f32 1.0, %v801
        %v803 = vrcp.pop %v768
        %v804 = vmul.f32 %v768, %v803
        %v805 = vsub.f32 1.0, %v804
        %v806 = vmul.f32 %v803, %v805
        %v807 = vadd.f32 %v803, %v806
        %vm808 = vweird.f32 %v768
        %vm809 = vweird.f32 %v803
        %vm810 = vmor %vm808, %vm809
        %v811 = vsel %vm810, %v803, %v807
        %v812 = vand.u32 2147483647, %v768
        %vm813 = vcmp.eq.f32.partialorder %v812, 8.507059e+37
        %v814 = vand.u32 %v768, 2147483648
        %v815 = vor.u32 1.1754944e-38, %v814
        %v816 = vsel %vm813, %v815, %v811
        %v817 = vmul.f32 1.0, %v816
        %v818 = vrcp.pop %v769
        %v819 = vmul.f32 %v769, %v818
        %v820 = vsub.f32 1.0, %v819
        %v821 = vmul.f32 %v818, %v820
        %v822 = vadd.f32 %v818, %v821
        %vm823 = vweird.f32 %v769
        %vm824 = vweird.f32 %v818
        %vm825 = vmor %vm823, %vm824
        %v826 = vsel %vm825, %v818, %v822
        %v827 = vand.u32 2147483647, %v769
        %vm828 = vcmp.eq.f32.partialorder %v827, 8.507059e+37
        %v829 = vand.u32 %v769, 2147483648
        %v830 = vor.u32 1.1754944e-38, %v829
        %v831 = vsel %vm828, %v830, %v826
        %v832 = vmul.f32 1.0, %v831
        %v833 = vrcp.pop %v770
        %v834 = vmul.f32 %v770, %v833
        %v835 = vsub.f32 1.0, %v834
        %v836 = vmul.f32 %v833, %v835
        %v837 = vadd.f32 %v833, %v836
        %vm838 = vweird.f32 %v770
        %vm839 = vweird.f32 %v833
        %vm840 = vmor %vm838, %vm839
        %v841 = vsel %vm840, %v833, %v837
        %v842 = vand.u32 2147483647, %v770
        %vm843 = vcmp.eq.f32.partialorder %v842, 8.507059e+37
        %v844 = vand.u32 %v770, 2147483648
        %v845 = vor.u32 1.1754944e-38, %v844
        %v846 = vsel %vm843, %v845, %v841
        %v847 = vmul.f32 1.0, %v846
        %v848 = vrcp.pop %v771
        %v849 = vmul.f32 %v771, %v848
        %v850 = vsub.f32 1.0, %v849
        %v851 = vmul.f32 %v848, %v850
        %v852 = vadd.f32 %v848, %v851
        %vm853 = vweird.f32 %v771
        %vm854 = vweird.f32 %v848
        %vm855 = vmor %vm853, %vm854
        %v856 = vsel %vm855, %v848, %v852
        %v857 = vand.u32 2147483647, %v771
        %vm858 = vcmp.eq.f32.partialorder %v857, 8.507059e+37
        %v859 = vand.u32 %v771, 2147483648
        %v860 = vor.u32 1.1754944e-38, %v859
        %v861 = vsel %vm858, %v860, %v856
        %v862 = vmul.f32 1.0, %v861
        %v863 = vrcp.pop %v772
        %v864 = vmul.f32 %v772, %v863
        %v865 = vsub.f32 1.0, %v864
        %v866 = vmul.f32 %v863, %v865
        %v867 = vadd.f32 %v863, %v866
        %vm868 = vweird.f32 %v772
        %vm869 = vweird.f32 %v863
        %vm870 = vmor %vm868, %vm869
        %v871 = vsel %vm870, %v863, %v867
        %v872 = vand.u32 2147483647, %v772
        %vm873 = vcmp.eq.f32.partialorder %v872, 8.507059e+37
        %v874 = vand.u32 %v772, 2147483648
        %v875 = vor.u32 1.1754944e-38, %v874
        %v876 = vsel %vm873, %v875, %v871
        %v877 = vmul.f32 1.0, %v876
        %878 = vst [vmem:[%s217] sm:$0xff] %v787
        %879 = vst [vmem:[%s217 + $0x8] sm:$0xff] %v802
        %880 = vst [vmem:[%s217 + $0x10] sm:$0xff] %v817
        %881 = vst [vmem:[%s217 + $0x18] sm:$0xff] %v832
        %882 = vst [vmem:[%s217 + $0x20] sm:$0xff] %v847
        %883 = vst [vmem:[%s217 + $0x28] sm:$0xff] %v862
        %884 = vst.msk [vmem:[%s217 + $0x30] sm:$0xff] %vm332, %v877
        %s885 = sand.u32 %s137, 1
        %s886 = scalar_lea.sflag [#allocation3], %s885
        %s887 = sand.u32 %s137, 1
        %s888 = smul.addr %s887, 56
        %s889 = scalar_lea.vmem [#allocation2], %s888
        // Predicated region
        $region41: #{_autoencoder_pallas.1} parent=39 // pred_check
          %p890 = pneg %p147
        $region42: #{_autoencoder_pallas.1} parent=39 // pred_check_branch
          %892 = sbr.rel (%p890) target = $region44
        $region43: #{_autoencoder_pallas.1} parent=39 // pred_region
          %894 = vsyncadd %s886, 0
          %s895 = smul.addr %s19, 7
          %s896 = smul.addr %s895, 8
          %s897 = scalar_lea.hbm %s5, %s896
          %s899 = sshll.u32 %s889, 4
          %s900 = int_to_ptr.vmem [resolvable:$true] %s899
          %s901 = sshll.u32 %s897, 4
          %s902 = int_to_ptr.hbm [resolvable:$true] %s901
          %904 = dma.vmem_to_hbm [thread:$0]  %s900, 896, %s902, %s886
        $region44: #{_autoencoder_pallas.1} parent=39 // pred_fallthru
          _
      $region40: #{_autoencoder_pallas.1} parent=5 // pred_fallthru
        _
      %p905 = scmp.le.s32.totalorder 2, %s14
      // Predicated region
      $region45: #{_autoencoder_pallas.1} parent=5 // pred_check
        %p906 = pneg %p905
      $region46: #{_autoencoder_pallas.1} parent=5 // pred_check_branch
        %908 = sbr.rel (%p906) target = $region48
      $region47: #{_autoencoder_pallas.1} parent=5 // pred_region
        %s909 = ssub.s32 %s14, 2
        // Predicated region
        $region49: #{_autoencoder_pallas.1} parent=47 // pred_check
          %p910 = pneg %p153
        $region50: #{_autoencoder_pallas.1} parent=47 // pred_check_branch
          %912 = sbr.rel (%p910) target = $region52
        $region51: #{_autoencoder_pallas.1} parent=47 // pred_region
          %s913 = sand.u32 %s138, 1
          %s914 = scalar_lea.sflag [#allocation3], %s913
          %s915 = sand.u32 %s138, 1
          %s916 = smul.addr %s915, 56
          %s917 = scalar_lea.vmem [#allocation2], %s916
          %919 = dma.done %s914, 896
        $region52: #{_autoencoder_pallas.1} parent=47 // pred_fallthru
          _
      $region48: #{_autoencoder_pallas.1} parent=5 // pred_fallthru
        _
    $region6: #{_autoencoder_pallas.1} parent=1 // loop_footer
      %s18 = sadd.s32 1, %s14
    $region7: #{_autoencoder_pallas.1} parent=1 // loop_footer_branch
      %13 = sbr.rel target = $region3
    $region8: #{_autoencoder_pallas.1} parent=1 // loop_exit
      _
    %920 = vsyncpa [#allocation3], 1
    %s921 = scalar_lea.sflag [#allocation3], 1
    %922 = vsyncpa %s921, 1

// kernel: _autoencoder_pallas.1
$region0: #{_autoencoder_pallas.1}
  #allocation0 [shape = 'u32[]', space=smem, size = 0x4, offset = 0x4, fixed_abs, tag = 'smem constant byte address 0x4 - core index']
  #allocation1 [shape = 'u32[72,128]{1,0:T(1,128)}', space=vmem, size = 0x9000, scoped, tag = 'internal scratch']
  %s0 = inlined_call_operand.vmem [shape: f32[16,784], index: 0, kind: input, shape index: {}]
  %s1 = inlined_call_operand.vmem [shape: f32[784,128], index: 1, kind: input, shape index: {}]
  %s2 = inlined_call_operand.vmem [shape: f32[1,128], index: 2, kind: input, shape index: {}]
  %s3 = inlined_call_operand.vmem [shape: f32[128,784], index: 3, kind: input, shape index: {}]
  %s4 = inlined_call_operand.vmem [shape: f32[1,784], index: 4, kind: input, shape index: {}]
  %s5 = inlined_call_operand.hbm [shape: f32[16,784], index: 5, kind: output, shape index: {}]
  %s6 = sld [smem:[#allocation0]]
  $region53: #{_autoencoder_pallas.1} parent=0
    _
  %s8 = ssub.s32 1, %s6
  %s9 = scalar_select 0, %s8, %s6
  $region1: #{_autoencoder_pallas.1} parent=0
    #allocation2 [shape = 'u8[57344]{0}', space=vmem, size = 0xe000, scoped, tag = 'output window, operand 0']
    #allocation3 [shape = 's32[2]{0}', space=sflag, size = 0x8, scoped, tag = 'scoped memory for _autoencoder_pallas.1']
    %10 = vsyncpa [#allocation3], 0
    %s11 = scalar_lea.sflag [#allocation3], 1
    %12 = vsyncpa %s11, 0
    loop: start=0, step=1, limit=4
    $region2: #{_autoencoder_pallas.1} parent=1 // loop_pre_header
      _
    $region3: #{_autoencoder_pallas.1} parent=1 // loop_header
      %s14 = sphi 0, %s18
      %p15 = scmp.ge.s32.totalorder %s14, 4
      %s24 = sphi 0, %s26
      %s27 = sphi 0, %s24
      %s28 = sphi 0, %s27
      %s44 = sphi 0, %s28
      %s48 = sphi 0, %s48
      %s50 = sphi 0, %s48
      %s51 = sphi 0, %s50
      %s65 = sphi 0, %s51
      %s69 = sphi 0, %s69
      %s71 = sphi 0, %s69
      %s72 = sphi 0, %s71
      %s86 = sphi 0, %s72
      %s90 = sphi 0, %s90
      %s92 = sphi 0, %s90
      %s93 = sphi 0, %s92
      %s107 = sphi 0, %s93
      %s111 = sphi 0, %s111
      %s113 = sphi 0, %s111
      %s114 = sphi 0, %s113
      %s128 = sphi 0, %s114
      %s134 = sphi 0, %s136
      %s137 = sphi 0, %s134
      %s138 = sphi 0, %s137
      %s154 = sphi 0, %s138
    $region4: #{_autoencoder_pallas.1} parent=1 // loop_header_branch
      %17 = sbr.rel (%p15) target = $region8
    $region5: #{_autoencoder_pallas.1} parent=1 // loop_body
      %s19 = ssub.s32 %s14, 1
      %s20 = ssub.s32 %s14, 2
      %s21 = sadd.s32 %s14, 1
      %s22 = ssub.s32 %s14, %s21
      %p23 = scmp.eq.s32.totalorder %s22, 0
      %s25 = sadd.s32 %s24, 1
      %s26 = scalar_select %p23, %s24, %s25
      %p29 = pneg %p23
      %p30 = scmp.eq.s32.totalorder %s14, 1
      %p31 = por %p29, %p30
      %p32 = scmp.ne.s32.totalorder %s24, %s27
      %p33 = scmp.eq.s32.totalorder %s14, 0
      %p34 = por %p32, %p33
      %p35 = scmp.ne.s32.totalorder %s24, %s27
      %p36 = scmp.eq.s32.totalorder %s19, 1
      %p37 = por %p35, %p36
      %p38 = scmp.ne.s32.totalorder %s27, %s28
      %p39 = scmp.eq.s32.totalorder %s19, 0
      %p40 = por %p38, %p39
      %p41 = scmp.ne.s32.totalorder %s27, %s28
      %p42 = scmp.eq.s32.totalorder %s20, 1
      %p43 = por %p41, %p42
      %p45 = scmp.ne.s32.totalorder %s28, %s44
      %p46 = scmp.eq.s32.totalorder %s20, 0
      %p47 = por %p45, %p46
      %s49 = sadd.s32 %s48, 1
      %p52 = scmp.eq.s32.totalorder %s14, 1
      %p53 = scmp.ne.s32.totalorder %s48, %s50
      %p54 = scmp.eq.s32.totalorder %s14, 0
      %p55 = por %p53, %p54
      %p56 = scmp.ne.s32.totalorder %s48, %s50
      %p57 = scmp.eq.s32.totalorder %s19, 1
      %p58 = por %p56, %p57
      %p59 = scmp.ne.s32.totalorder %s50, %s51
      %p60 = scmp.eq.s32.totalorder %s19, 0
      %p61 = por %p59, %p60
      %p62 = scmp.ne.s32.totalorder %s50, %s51
      %p63 = scmp.eq.s32.totalorder %s20, 1
      %p64 = por %p62, %p63
      %p66 = scmp.ne.s32.totalorder %s51, %s65
      %p67 = scmp.eq.s32.totalorder %s20, 0
      %p68 = por %p66, %p67
      %s70 = sadd.s32 %s69, 1
      %p73 = scmp.eq.s32.totalorder %s14, 1
      %p74 = scmp.ne.s32.totalorder %s69, %s71
      %p75 = scmp.eq.s32.totalorder %s14, 0
      %p76 = por %p74, %p75
      %p77 = scmp.ne.s32.totalorder %s69, %s71
      %p78 = scmp.eq.s32.totalorder %s19, 1
      %p79 = por %p77, %p78
      %p80 = scmp.ne.s32.totalorder %s71, %s72
      %p81 = scmp.eq.s32.totalorder %s19, 0
      %p82 = por %p80, %p81
      %p83 = scmp.ne.s32.totalorder %s71, %s72
      %p84 = scmp.eq.s32.totalorder %s20, 1
      %p85 = por %p83, %p84
      %p87 = scmp.ne.s32.totalorder %s72, %s86
      %p88 = scmp.eq.s32.totalorder %s20, 0
      %p89 = por %p87, %p88
      %s91 = sadd.s32 %s90, 1
      %p94 = scmp.eq.s32.totalorder %s14, 1
      %p95 = scmp.ne.s32.totalorder %s90, %s92
      %p96 = scmp.eq.s32.totalorder %s14, 0
      %p97 = por %p95, %p96
      %p98 = scmp.ne.s32.totalorder %s90, %s92
      %p99 = scmp.eq.s32.totalorder %s19, 1
      %p100 = por %p98, %p99
      %p101 = scmp.ne.s32.totalorder %s92, %s93
      %p102 = scmp.eq.s32.totalorder %s19, 0
      %p103 = por %p101, %p102
      %p104 = scmp.ne.s32.totalorder %s92, %s93
      %p105 = scmp.eq.s32.totalorder %s20, 1
      %p106 = por %p104, %p105
      %p108 = scmp.ne.s32.totalorder %s93, %s107
      %p109 = scmp.eq.s32.totalorder %s20, 0
      %p110 = por %p108, %p109
      %s112 = sadd.s32 %s111, 1
      %p115 = scmp.eq.s32.totalorder %s14, 1
      %p116 = scmp.ne.s32.totalorder %s111, %s113
      %p117 = scmp.eq.s32.totalorder %s14, 0
      %p118 = por %p116, %p117
      %p119 = scmp.ne.s32.totalorder %s111, %s113
      %p120 = scmp.eq.s32.totalorder %s19, 1
      %p121 = por %p119, %p120
      %p122 = scmp.ne.s32.totalorder %s113, %s114
      %p123 = scmp.eq.s32.totalorder %s19, 0
      %p124 = por %p122, %p123
      %p125 = scmp.ne.s32.totalorder %s113, %s114
      %p126 = scmp.eq.s32.totalorder %s20, 1
      %p127 = por %p125, %p126
      %p129 = scmp.ne.s32.totalorder %s114, %s128
      %p130 = scmp.eq.s32.totalorder %s20, 0
      %p131 = por %p129, %p130
      %s132 = ssub.s32 %s14, %s21
      %p133 = scmp.eq.s32.totalorder %s132, 0
      %s135 = sadd.s32 %s134, 1
      %s136 = scalar_select %p133, %s134, %s135
      %p139 = pneg %p133
      %p140 = scmp.eq.s32.totalorder %s14, 1
      %p141 = por %p139, %p140
      %p142 = scmp.ne.s32.totalorder %s134, %s137
      %p143 = scmp.eq.s32.totalorder %s14, 0
      %p144 = por %p142, %p143
      %p145 = scmp.ne.s32.totalorder %s134, %s137
      %p146 = scmp.eq.s32.totalorder %s19, 1
      %p147 = por %p145, %p146
      %p148 = scmp.ne.s32.totalorder %s137, %s138
      %p149 = scmp.eq.s32.totalorder %s19, 0
      %p150 = por %p148, %p149
      %p151 = scmp.ne.s32.totalorder %s137, %s138
      %p152 = scmp.eq.s32.totalorder %s20, 1
      %p153 = por %p151, %p152
      %p155 = scmp.ne.s32.totalorder %s138, %s154
      %p156 = scmp.eq.s32.totalorder %s20, 0
      %p157 = por %p155, %p156
      %p158 = scmp.le.s32.totalorder 1, %s14
      %p159 = scmp.lt.s32.totalorder %s14, 3
      %p160 = pnand %p158, %p159
      %p161 = pneg %p160
      // Predicated region
      $region9: #{_autoencoder_pallas.1} parent=5 // pred_check
        _
      $region10: #{_autoencoder_pallas.1} parent=5 // pred_check_branch
        %163 = sbr.rel (%p160) target = $region12
      $region11: #{_autoencoder_pallas.1} parent=5 // pred_region
        %s164 = ssub.s32 %s14, 1
        // Predicated region
        $region13: #{_autoencoder_pallas.1} parent=11 // pred_check
          %p165 = pneg %p61
        $region14: #{_autoencoder_pallas.1} parent=11 // pred_check_branch
          %167 = sbr.rel (%p165) target = $region16
        $region15: #{_autoencoder_pallas.1} parent=11 // pred_region
          _
        $region16: #{_autoencoder_pallas.1} parent=11 // pred_fallthru
          _
        // Predicated region
        $region17: #{_autoencoder_pallas.1} parent=11 // pred_check
          %p168 = pneg %p82
        $region18: #{_autoencoder_pallas.1} parent=11 // pred_check_branch
          %170 = sbr.rel (%p168) target = $region20
        $region19: #{_autoencoder_pallas.1} parent=11 // pred_region
          _
        $region20: #{_autoencoder_pallas.1} parent=11 // pred_fallthru
          _
        // Predicated region
        $region21: #{_autoencoder_pallas.1} parent=11 // pred_check
          %p171 = pneg %p103
        $region22: #{_autoencoder_pallas.1} parent=11 // pred_check_branch
          %173 = sbr.rel (%p171) target = $region24
        $region23: #{_autoencoder_pallas.1} parent=11 // pred_region
          _
        $region24: #{_autoencoder_pallas.1} parent=11 // pred_fallthru
          _
        // Predicated region
        $region25: #{_autoencoder_pallas.1} parent=11 // pred_check
          %p174 = pneg %p124
        $region26: #{_autoencoder_pallas.1} parent=11 // pred_check_branch
          %176 = sbr.rel (%p174) target = $region28
        $region27: #{_autoencoder_pallas.1} parent=11 // pred_region
          _
        $region28: #{_autoencoder_pallas.1} parent=11 // pred_fallthru
          _
      $region12: #{_autoencoder_pallas.1} parent=5 // pred_fallthru
        _
      %p177 = scmp.lt.s32.totalorder %s14, 2
      // Predicated region
      $region29: #{_autoencoder_pallas.1} parent=5 // pred_check
        %p178 = pneg %p177
      $region30: #{_autoencoder_pallas.1} parent=5 // pred_check_branch
        %180 = sbr.rel (%p178) target = $region32
      $region31: #{_autoencoder_pallas.1} parent=5 // pred_region
        // Predicated region
        $region33: #{_autoencoder_pallas.1} parent=31 // pred_check
          %p181 = pneg %p34
        $region34: #{_autoencoder_pallas.1} parent=31 // pred_check_branch
          %183 = sbr.rel (%p181) target = $region36
        $region35: #{_autoencoder_pallas.1} parent=31 // pred_region
          %p184 = scmp.lt.s32.totalorder %s14, 1
          %s185 = scalar_select %p184, %s14, 1
          %s186 = smul.addr %s185, 7
          %s187 = smul.addr %s186, 8
          %s188 = scalar_lea.vmem %s0, %s187
        $region36: #{_autoencoder_pallas.1} parent=31 // pred_fallthru
          _
      $region32: #{_autoencoder_pallas.1} parent=5 // pred_fallthru
        _
      %p189 = scmp.le.s32.totalorder 1, %s14
      %p190 = scmp.lt.s32.totalorder %s14, 3
      %p191 = pnand %p189, %p190
      %p192 = pneg %p191
      // Predicated region
      $region37: #{_autoencoder_pallas.1} parent=5 // pred_check
        _
      $region38: #{_autoencoder_pallas.1} parent=5 // pred_check_branch
        %194 = sbr.rel (%p191) target = $region40
      $region39: #{_autoencoder_pallas.1} parent=5 // pred_region
        %s195 = ssub.s32 %s14, 1
        %p196 = scmp.lt.s32.totalorder %s19, 1
        %s197 = scalar_select %p196, %s19, 1
        %s198 = smul.addr %s197, 7
        %s199 = smul.addr %s198, 8
        %s200 = scalar_lea.vmem %s0, %s199
        %p201 = pneg %p40
        %p202 = pneg %p37
        %p203 = pneg %p61
        %p204 = pneg %p58
        %p205 = pneg %p82
        %p206 = pneg %p79
        %p207 = pneg %p103
        %p208 = pneg %p100
        %p209 = pneg %p124
        %p210 = pneg %p121
        %p211 = pneg %p150
        %p212 = pneg %p147
        %s213 = sand.u32 %s137, 1
        %s214 = scalar_lea.sflag [#allocation3], %s213
        %s215 = sand.u32 %s137, 1
        %s216 = smul.addr %s215, 56
        %s217 = scalar_lea.vmem [#allocation2], %s216
        %p218 = scmp.lt.s32.totalorder %s19, 1
        %s219 = scalar_select %p218, %s19, 1
        %s220 = smul.addr %s219, 7
        %s221 = smul.addr %s220, 8
        %s222 = scalar_lea.vmem %s0, %s221
        %v223 = vld [vmem:[%s222] sm:$0xff]
        %v224 = vld [vmem:[%s222 + $0x8] sm:$0xff]
        %v225 = vld [vmem:[%s222 + $0x10] sm:$0xff]
        %v226 = vld [vmem:[%s222 + $0x18] sm:$0xff]
        %v227 = vld [vmem:[%s222 + $0x20] sm:$0xff]
        %v228 = vld [vmem:[%s222 + $0x28] sm:$0xff]
        %v229 = vld [vmem:[%s222 + $0x30] sm:$0xff]
        %v230 = vld [vmem:[%s1] sm:$0xff]
        %v231 = vld [vmem:[%s1 + $0x8] sm:$0xff]
        %v232 = vld [vmem:[%s1 + $0x10] sm:$0xff]
        %v233 = vld [vmem:[%s1 + $0x18] sm:$0xff]
        %v234 = vld [vmem:[%s1 + $0x20] sm:$0xff]
        %v235 = vld [vmem:[%s1 + $0x28] sm:$0xff]
        %v236 = vld [vmem:[%s1 + $0x30] sm:$0xff]
        %v237 = vld [vmem:[%s1 + $0x38] sm:$0xff]
        %v238 = vld [vmem:[%s1 + $0x40] sm:$0xff]
        %v239 = vld [vmem:[%s1 + $0x48] sm:$0xff]
        %v240 = vld [vmem:[%s1 + $0x50] sm:$0xff]
        %v241 = vld [vmem:[%s1 + $0x58] sm:$0xff]
        %v242 = vld [vmem:[%s1 + $0x60] sm:$0xff]
        %v243 = vld [vmem:[%s1 + $0x68] sm:$0xff]
        %v244 = vld [vmem:[%s1 + $0x70] sm:$0xff]
        %v245 = vld [vmem:[%s1 + $0x78] sm:$0xff]
        %v246 = vld [vmem:[%s1 + $0x80] sm:$0xff]
        %v247 = vld [vmem:[%s1 + $0x88] sm:$0xff]
        %v248 = vld [vmem:[%s1 + $0x90] sm:$0xff]
        %v249 = vld [vmem:[%s1 + $0x98] sm:$0xff]
        %v250 = vld [vmem:[%s1 + $0xa0] sm:$0xff]
        %v251 = vld [vmem:[%s1 + $0xa8] sm:$0xff]
        %v252 = vld [vmem:[%s1 + $0xb0] sm:$0xff]
        %v253 = vld [vmem:[%s1 + $0xb8] sm:$0xff]
        %v254 = vld [vmem:[%s1 + $0xc0] sm:$0xff]
        %v255 = vld [vmem:[%s1 + $0xc8] sm:$0xff]
        %v256 = vld [vmem:[%s1 + $0xd0] sm:$0xff]
        %v257 = vld [vmem:[%s1 + $0xd8] sm:$0xff]
        %v258 = vld [vmem:[%s1 + $0xe0] sm:$0xff]
        %v259 = vld [vmem:[%s1 + $0xe8] sm:$0xff]
        %v260 = vld [vmem:[%s1 + $0xf0] sm:$0xff]
        %v261 = vld [vmem:[%s1 + $0xf8] sm:$0xff]
        %v262 = vld [vmem:[%s1 + $0x100] sm:$0xff]
        %v263 = vld [vmem:[%s1 + $0x108] sm:$0xff]
        %v264 = vld [vmem:[%s1 + $0x110] sm:$0xff]
        %v265 = vld [vmem:[%s1 + $0x118] sm:$0xff]
        %v266 = vld [vmem:[%s1 + $0x120] sm:$0xff]
        %v267 = vld [vmem:[%s1 + $0x128] sm:$0xff]
        %v268 = vld [vmem:[%s1 + $0x130] sm:$0xff]
        %v269 = vld [vmem:[%s1 + $0x138] sm:$0xff]
        %v270 = vld [vmem:[%s1 + $0x140] sm:$0xff]
        %v271 = vld [vmem:[%s1 + $0x148] sm:$0xff]
        %v272 = vld [vmem:[%s1 + $0x150] sm:$0xff]
        %v273 = vld [vmem:[%s1 + $0x158] sm:$0xff]
        %v274 = vld [vmem:[%s1 + $0x160] sm:$0xff]
        %v275 = vld [vmem:[%s1 + $0x168] sm:$0xff]
        %v276 = vld [vmem:[%s1 + $0x170] sm:$0xff]
        %v277 = vld [vmem:[%s1 + $0x178] sm:$0xff]
        %v278 = vld [vmem:[%s1 + $0x180] sm:$0xff]
        %v279 = vld [vmem:[%s1 + $0x188] sm:$0xff]
        %v280 = vld [vmem:[%s1 + $0x190] sm:$0xff]
        %v281 = vld [vmem:[%s1 + $0x198] sm:$0xff]
        %v282 = vld [vmem:[%s1 + $0x1a0] sm:$0xff]
        %v283 = vld [vmem:[%s1 + $0x1a8] sm:$0xff]
        %v284 = vld [vmem:[%s1 + $0x1b0] sm:$0xff]
        %v285 = vld [vmem:[%s1 + $0x1b8] sm:$0xff]
        %v286 = vld [vmem:[%s1 + $0x1c0] sm:$0xff]
        %v287 = vld [vmem:[%s1 + $0x1c8] sm:$0xff]
        %v288 = vld [vmem:[%s1 + $0x1d0] sm:$0xff]
        %v289 = vld [vmem:[%s1 + $0x1d8] sm:$0xff]
        %v290 = vld [vmem:[%s1 + $0x1e0] sm:$0xff]
        %v291 = vld [vmem:[%s1 + $0x1e8] sm:$0xff]
        %v292 = vld [vmem:[%s1 + $0x1f0] sm:$0xff]
        %v293 = vld [vmem:[%s1 + $0x1f8] sm:$0xff]
        %v294 = vld [vmem:[%s1 + $0x200] sm:$0xff]
        %v295 = vld [vmem:[%s1 + $0x208] sm:$0xff]
        %v296 = vld [vmem:[%s1 + $0x210] sm:$0xff]
        %v297 = vld [vmem:[%s1 + $0x218] sm:$0xff]
        %v298 = vld [vmem:[%s1 + $0x220] sm:$0xff]
        %v299 = vld [vmem:[%s1 + $0x228] sm:$0xff]
        %v300 = vld [vmem:[%s1 + $0x230] sm:$0xff]
        %v301 = vld [vmem:[%s1 + $0x238] sm:$0xff]
        %v302 = vld [vmem:[%s1 + $0x240] sm:$0xff]
        %v303 = vld [vmem:[%s1 + $0x248] sm:$0xff]
        %v304 = vld [vmem:[%s1 + $0x250] sm:$0xff]
        %v305 = vld [vmem:[%s1 + $0x258] sm:$0xff]
        %v306 = vld [vmem:[%s1 + $0x260] sm:$0xff]
        %v307 = vld [vmem:[%s1 + $0x268] sm:$0xff]
        %v308 = vld [vmem:[%s1 + $0x270] sm:$0xff]
        %v309 = vld [vmem:[%s1 + $0x278] sm:$0xff]
        %v310 = vld [vmem:[%s1 + $0x280] sm:$0xff]
        %v311 = vld [vmem:[%s1 + $0x288] sm:$0xff]
        %v312 = vld [vmem:[%s1 + $0x290] sm:$0xff]
        %v313 = vld [vmem:[%s1 + $0x298] sm:$0xff]
        %v314 = vld [vmem:[%s1 + $0x2a0] sm:$0xff]
        %v315 = vld [vmem:[%s1 + $0x2a8] sm:$0xff]
        %v316 = vld [vmem:[%s1 + $0x2b0] sm:$0xff]
        %v317 = vld [vmem:[%s1 + $0x2b8] sm:$0xff]
        %v318 = vld [vmem:[%s1 + $0x2c0] sm:$0xff]
        %v319 = vld [vmem:[%s1 + $0x2c8] sm:$0xff]
        %v320 = vld [vmem:[%s1 + $0x2d0] sm:$0xff]
        %v321 = vld [vmem:[%s1 + $0x2d8] sm:$0xff]
        %v322 = vld [vmem:[%s1 + $0x2e0] sm:$0xff]
        %v323 = vld [vmem:[%s1 + $0x2e8] sm:$0xff]
        %v324 = vld [vmem:[%s1 + $0x2f0] sm:$0xff]
        %v325 = vld [vmem:[%s1 + $0x2f8] sm:$0xff]
        %v326 = vld [vmem:[%s1 + $0x300] sm:$0xff]
        %v327 = vld [vmem:[%s1 + $0x308] sm:$0xff]
        %v328 = vld [vmem:[%s2] sm:$0x1]
        %v330 = vperm.slane %v328, 0
        %vm332 = vcmask 130048
        %v334 = vsel %vm332, %v229, 0
        %336 = vmatpush.msra.mxu0 %v245
        %337 = vmatpush.msra.mxu0 %v244
        %338 = vmatpush.msra.mxu0 %v243
        %339 = vmatpush.msra.mxu0 %v242
        %340 = vmatpush.msra.mxu0 %v241
        %341 = vmatpush.msra.mxu0 %v240
        %342 = vmatpush.msra.mxu0 %v239
        %343 = vmatpush.msra.mxu0 %v238
        %344 = vmatpush.msra.mxu0 %v237
        %345 = vmatpush.msra.mxu0 %v236
        %346 = vmatpush.msra.mxu0 %v235
        %347 = vmatpush.msra.mxu0 %v234
        %348 = vmatpush.msra.mxu0 %v233
        %349 = vmatpush.msra.mxu0 %v232
        %350 = vmatpush.msra.mxu0 %v231
        %351 = vmatpush.msra.mxu0 %v230
        %352 = vmatmul.f32.gmra.mxu0 %v223
        %v353 = vpop.f32.mrf.mxu0
        %v354 = vadd.f32 %v330, %v353
        %355 = vdwg.mxu0
        %356 = vmatpush.msra.mxu0 %v261
        %357 = vmatpush.msra.mxu0 %v260
        %358 = vmatpush.msra.mxu0 %v259
        %359 = vmatpush.msra.mxu0 %v258
        %360 = vmatpush.msra.mxu0 %v257
        %361 = vmatpush.msra.mxu0 %v256
        %362 = vmatpush.msra.mxu0 %v255
        %363 = vmatpush.msra.mxu0 %v254
        %364 = vmatpush.msra.mxu0 %v253
        %365 = vmatpush.msra.mxu0 %v252
        %366 = vmatpush.msra.mxu0 %v251
        %367 = vmatpush.msra.mxu0 %v250
        %368 = vmatpush.msra.mxu0 %v249
        %369 = vmatpush.msra.mxu0 %v248
        %370 = vmatpush.msra.mxu0 %v247
        %371 = vmatpush.msra.mxu0 %v246
        %372 = vmatmul.f32.gmra.mxu0 %v224
        %v373 = vpop.f32.mrf.mxu0
        %v374 = vadd.f32 %v354, %v373
        %375 = vdwg.mxu0
        %376 = vmatpush.msra.mxu0 %v277
        %377 = vmatpush.msra.mxu0 %v276
        %378 = vmatpush.msra.mxu0 %v275
        %379 = vmatpush.msra.mxu0 %v274
        %380 = vmatpush.msra.mxu0 %v273
        %381 = vmatpush.msra.mxu0 %v272
        %382 = vmatpush.msra.mxu0 %v271
        %383 = vmatpush.msra.mxu0 %v270
        %384 = vmatpush.msra.mxu0 %v269
        %385 = vmatpush.msra.mxu0 %v268
        %386 = vmatpush.msra.mxu0 %v267
        %387 = vmatpush.msra.mxu0 %v266
        %388 = vmatpush.msra.mxu0 %v265
        %389 = vmatpush.msra.mxu0 %v264
        %390 = vmatpush.msra.mxu0 %v263
        %391 = vmatpush.msra.mxu0 %v262
        %392 = vmatmul.f32.gmra.mxu0 %v225
        %v393 = vpop.f32.mrf.mxu0
        %v394 = vadd.f32 %v374, %v393
        %395 = vdwg.mxu0
        %396 = vmatpush.msra.mxu0 %v293
        %397 = vmatpush.msra.mxu0 %v292
        %398 = vmatpush.msra.mxu0 %v291
        %399 = vmatpush.msra.mxu0 %v290
        %400 = vmatpush.msra.mxu0 %v289
        %401 = vmatpush.msra.mxu0 %v288
        %402 = vmatpush.msra.mxu0 %v287
        %403 = vmatpush.msra.mxu0 %v286
        %404 = vmatpush.msra.mxu0 %v285
        %405 = vmatpush.msra.mxu0 %v284
        %406 = vmatpush.msra.mxu0 %v283
        %407 = vmatpush.msra.mxu0 %v282
        %408 = vmatpush.msra.mxu0 %v281
        %409 = vmatpush.msra.mxu0 %v280
        %410 = vmatpush.msra.mxu0 %v279
        %411 = vmatpush.msra.mxu0 %v278
        %412 = vmatmul.f32.gmra.mxu0 %v226
        %v413 = vpop.f32.mrf.mxu0
        %v414 = vadd.f32 %v394, %v413
        %415 = vdwg.mxu0
        %416 = vmatpush.msra.mxu0 %v309
        %417 = vmatpush.msra.mxu0 %v308
        %418 = vmatpush.msra.mxu0 %v307
        %419 = vmatpush.msra.mxu0 %v306
        %420 = vmatpush.msra.mxu0 %v305
        %421 = vmatpush.msra.mxu0 %v304
        %422 = vmatpush.msra.mxu0 %v303
        %423 = vmatpush.msra.mxu0 %v302
        %424 = vmatpush.msra.mxu0 %v301
        %425 = vmatpush.msra.mxu0 %v300
        %426 = vmatpush.msra.mxu0 %v299
        %427 = vmatpush.msra.mxu0 %v298
        %428 = vmatpush.msra.mxu0 %v297
        %429 = vmatpush.msra.mxu0 %v296
        %430 = vmatpush.msra.mxu0 %v295
        %431 = vmatpush.msra.mxu0 %v294
        %432 = vmatmul.f32.gmra.mxu0 %v227
        %v433 = vpop.f32.mrf.mxu0
        %v434 = vadd.f32 %v414, %v433
        %435 = vdwg.mxu0
        %436 = vmatpush.msra.mxu0 %v325
        %437 = vmatpush.msra.mxu0 %v324
        %438 = vmatpush.msra.mxu0 %v323
        %439 = vmatpush.msra.mxu0 %v322
        %440 = vmatpush.msra.mxu0 %v321
        %441 = vmatpush.msra.mxu0 %v320
        %442 = vmatpush.msra.mxu0 %v319
        %443 = vmatpush.msra.mxu0 %v318
        %444 = vmatpush.msra.mxu0 %v317
        %445 = vmatpush.msra.mxu0 %v316
        %446 = vmatpush.msra.mxu0 %v315
        %447 = vmatpush.msra.mxu0 %v314
        %448 = vmatpush.msra.mxu0 %v313
        %449 = vmatpush.msra.mxu0 %v312
        %450 = vmatpush.msra.mxu0 %v311
        %451 = vmatpush.msra.mxu0 %v310
        %452 = vmatmul.f32.gmra.mxu0 %v228
        %v453 = vpop.f32.mrf.mxu0
        %v454 = vadd.f32 %v434, %v453
        %455 = vdwg.mxu0
        %456 = vmatpush.msra.mxu0 0.0
        %457 = vmatpush.msra.mxu0 0.0
        %458 = vmatpush.msra.mxu0 0.0
        %459 = vmatpush.msra.mxu0 0.0
        %460 = vmatpush.msra.mxu0 0.0
        %461 = vmatpush.msra.mxu0 0.0
        %462 = vmatpush.msra.mxu0 0.0
        %463 = vmatpush.msra.mxu0 0.0
        %464 = vmatpush.msra.mxu0 0.0
        %465 = vmatpush.msra.mxu0 0.0
        %466 = vmatpush.msra.mxu0 0.0
        %467 = vmatpush.msra.mxu0 0.0
        %468 = vmatpush.msra.mxu0 0.0
        %469 = vmatpush.msra.mxu0 0.0
        %470 = vmatpush.msra.mxu0 %v327
        %471 = vmatpush.msra.mxu0 %v326
        %472 = vmatmul.f32.gmra.mxu0 %v334
        %v473 = vpop.f32.mrf.mxu0
        %v474 = vadd.f32 %v454, %v473
        %475 = vdwg.mxu0
        %v476 = vmax.f32 %v474, 0.0
        %v477 = vld [vmem:[%s3] sm:$0xff]
        %v478 = vld [vmem:[%s3 + $0x8] sm:$0xff]
        %v479 = vld [vmem:[%s3 + $0x10] sm:$0xff]
        %v480 = vld [vmem:[%s3 + $0x18] sm:$0xff]
        %v481 = vld [vmem:[%s3 + $0x20] sm:$0xff]
        %v482 = vld [vmem:[%s3 + $0x28] sm:$0xff]
        %v483 = vld [vmem:[%s3 + $0x30] sm:$0xff]
        %v484 = vld [vmem:[%s3 + $0x38] sm:$0xff]
        %v485 = vld [vmem:[%s3 + $0x40] sm:$0xff]
        %v486 = vld [vmem:[%s3 + $0x48] sm:$0xff]
        %v487 = vld [vmem:[%s3 + $0x50] sm:$0xff]
        %v488 = vld [vmem:[%s3 + $0x58] sm:$0xff]
        %v489 = vld [vmem:[%s3 + $0x60] sm:$0xff]
        %v490 = vld [vmem:[%s3 + $0x68] sm:$0xff]
        %v491 = vld [vmem:[%s3 + $0x70] sm:$0xff]
        %v492 = vld [vmem:[%s3 + $0x78] sm:$0xff]
        %v493 = vld [vmem:[%s3 + $0x80] sm:$0xff]
        %v494 = vld [vmem:[%s3 + $0x88] sm:$0xff]
        %v495 = vld [vmem:[%s3 + $0x90] sm:$0xff]
        %v496 = vld [vmem:[%s3 + $0x98] sm:$0xff]
        %v497 = vld [vmem:[%s3 + $0xa0] sm:$0xff]
        %v498 = vld [vmem:[%s3 + $0xa8] sm:$0xff]
        %v499 = vld [vmem:[%s3 + $0xb0] sm:$0xff]
        %v500 = vld [vmem:[%s3 + $0xb8] sm:$0xff]
        %v501 = vld [vmem:[%s3 + $0xc0] sm:$0xff]
        %v502 = vld [vmem:[%s3 + $0xc8] sm:$0xff]
        %v503 = vld [vmem:[%s3 + $0xd0] sm:$0xff]
        %v504 = vld [vmem:[%s3 + $0xd8] sm:$0xff]
        %v505 = vld [vmem:[%s3 + $0xe0] sm:$0xff]
        %v506 = vld [vmem:[%s3 + $0xe8] sm:$0xff]
        %v507 = vld [vmem:[%s3 + $0xf0] sm:$0xff]
        %v508 = vld [vmem:[%s3 + $0xf8] sm:$0xff]
        %v509 = vld [vmem:[%s3 + $0x100] sm:$0xff]
        %v510 = vld [vmem:[%s3 + $0x108] sm:$0xff]
        %v511 = vld [vmem:[%s3 + $0x110] sm:$0xff]
        %v512 = vld [vmem:[%s3 + $0x118] sm:$0xff]
        %v513 = vld [vmem:[%s3 + $0x120] sm:$0xff]
        %v514 = vld [vmem:[%s3 + $0x128] sm:$0xff]
        %v515 = vld [vmem:[%s3 + $0x130] sm:$0xff]
        %v516 = vld [vmem:[%s3 + $0x138] sm:$0xff]
        %v517 = vld [vmem:[%s3 + $0x140] sm:$0xff]
        %v518 = vld [vmem:[%s3 + $0x148] sm:$0xff]
        %v519 = vld [vmem:[%s3 + $0x150] sm:$0xff]
        %v520 = vld [vmem:[%s3 + $0x158] sm:$0xff]
        %v521 = vld [vmem:[%s3 + $0x160] sm:$0xff]
        %v522 = vld [vmem:[%s3 + $0x168] sm:$0xff]
        %v523 = vld [vmem:[%s3 + $0x170] sm:$0xff]
        %v524 = vld [vmem:[%s3 + $0x178] sm:$0xff]
        %v525 = vld [vmem:[%s3 + $0x180] sm:$0xff]
        %v526 = vld [vmem:[%s3 + $0x188] sm:$0xff]
        %v527 = vld [vmem:[%s3 + $0x190] sm:$0xff]
        %v528 = vld [vmem:[%s3 + $0x198] sm:$0xff]
        %v529 = vld [vmem:[%s3 + $0x1a0] sm:$0xff]
        %v530 = vld [vmem:[%s3 + $0x1a8] sm:$0xff]
        %v531 = vld [vmem:[%s3 + $0x1b0] sm:$0xff]
        %v532 = vld [vmem:[%s3 + $0x1b8] sm:$0xff]
        %v533 = vld [vmem:[%s3 + $0x1c0] sm:$0xff]
        %v534 = vld [vmem:[%s3 + $0x1c8] sm:$0xff]
        %v535 = vld [vmem:[%s3 + $0x1d0] sm:$0xff]
        %v536 = vld [vmem:[%s3 + $0x1d8] sm:$0xff]
        %v537 = vld [vmem:[%s3 + $0x1e0] sm:$0xff]
        %v538 = vld [vmem:[%s3 + $0x1e8] sm:$0xff]
        %v539 = vld [vmem:[%s3 + $0x1f0] sm:$0xff]
        %v540 = vld [vmem:[%s3 + $0x1f8] sm:$0xff]
        %v541 = vld [vmem:[%s3 + $0x200] sm:$0xff]
        %v542 = vld [vmem:[%s3 + $0x208] sm:$0xff]
        %v543 = vld [vmem:[%s3 + $0x210] sm:$0xff]
        %v544 = vld [vmem:[%s3 + $0x218] sm:$0xff]
        %v545 = vld [vmem:[%s3 + $0x220] sm:$0xff]
        %v546 = vld [vmem:[%s3 + $0x228] sm:$0xff]
        %v547 = vld [vmem:[%s3 + $0x230] sm:$0xff]
        %v548 = vld [vmem:[%s3 + $0x238] sm:$0xff]
        %v549 = vld [vmem:[%s3 + $0x240] sm:$0xff]
        %v550 = vld [vmem:[%s3 + $0x248] sm:$0xff]
        %v551 = vld [vmem:[%s3 + $0x250] sm:$0xff]
        %v552 = vld [vmem:[%s3 + $0x258] sm:$0xff]
        %v553 = vld [vmem:[%s3 + $0x260] sm:$0xff]
        %v554 = vld [vmem:[%s3 + $0x268] sm:$0xff]
        %v555 = vld [vmem:[%s3 + $0x270] sm:$0xff]
        %v556 = vld [vmem:[%s3 + $0x278] sm:$0xff]
        %v557 = vld [vmem:[%s3 + $0x280] sm:$0xff]
        %v558 = vld [vmem:[%s3 + $0x288] sm:$0xff]
        %v559 = vld [vmem:[%s3 + $0x290] sm:$0xff]
        %v560 = vld [vmem:[%s3 + $0x298] sm:$0xff]
        %v561 = vld [vmem:[%s3 + $0x2a0] sm:$0xff]
        %v562 = vld [vmem:[%s3 + $0x2a8] sm:$0xff]
        %v563 = vld [vmem:[%s3 + $0x2b0] sm:$0xff]
        %v564 = vld [vmem:[%s3 + $0x2b8] sm:$0xff]
        %v565 = vld [vmem:[%s3 + $0x2c0] sm:$0xff]
        %v566 = vld [vmem:[%s3 + $0x2c8] sm:$0xff]
        %v567 = vld [vmem:[%s3 + $0x2d0] sm:$0xff]
        %v568 = vld [vmem:[%s3 + $0x2d8] sm:$0xff]
        %v569 = vld [vmem:[%s3 + $0x2e0] sm:$0xff]
        %v570 = vld [vmem:[%s3 + $0x2e8] sm:$0xff]
        %v571 = vld [vmem:[%s3 + $0x2f0] sm:$0xff]
        %v572 = vld [vmem:[%s3 + $0x2f8] sm:$0xff]
        %v573 = vld [vmem:[%s3 + $0x300] sm:$0xff]
        %v574 = vld [vmem:[%s3 + $0x308] sm:$0xff]
        %v575 = vld [vmem:[%s3 + $0x310] sm:$0xff]
        %v576 = vld [vmem:[%s3 + $0x318] sm:$0xff]
        %v577 = vld [vmem:[%s3 + $0x320] sm:$0xff]
        %v578 = vld [vmem:[%s3 + $0x328] sm:$0xff]
        %v579 = vld [vmem:[%s3 + $0x330] sm:$0xff]
        %v580 = vld [vmem:[%s3 + $0x338] sm:$0xff]
        %v581 = vld [vmem:[%s3 + $0x340] sm:$0xff]
        %v582 = vld [vmem:[%s3 + $0x348] sm:$0xff]
        %v583 = vld [vmem:[%s3 + $0x350] sm:$0xff]
        %v584 = vld [vmem:[%s3 + $0x358] sm:$0xff]
        %v585 = vld [vmem:[%s3 + $0x360] sm:$0xff]
        %v586 = vld [vmem:[%s3 + $0x368] sm:$0xff]
        %v587 = vld [vmem:[%s3 + $0x370] sm:$0xff]
        %v588 = vld [vmem:[%s3 + $0x378] sm:$0xff]
        %v589 = vld [vmem:[%s4] sm:$0x7f]
        %v591 = vperm.slane %v589, 0
        %v592 = vperm.slane %v589, 1
        %v593 = vperm.slane %v589, 2
        %v594 = vperm.slane %v589, 3
        %v595 = vperm.slane %v589, 4
        %v596 = vperm.slane %v589, 5
        %v597 = vperm.slane %v589, 6
        %605 = vmatpush.msra.mxu0 %v582
        %606 = vmatpush.msra.mxu0 %v575
        %607 = vmatpush.msra.mxu0 %v568
        %608 = vmatpush.msra.mxu0 %v561
        %609 = vmatpush.msra.mxu0 %v554
        %610 = vmatpush.msra.mxu0 %v547
        %611 = vmatpush.msra.mxu0 %v540
        %612 = vmatpush.msra.mxu0 %v533
        %613 = vmatpush.msra.mxu0 %v526
        %614 = vmatpush.msra.mxu0 %v519
        %615 = vmatpush.msra.mxu0 %v512
        %616 = vmatpush.msra.mxu0 %v505
        %617 = vmatpush.msra.mxu0 %v498
        %618 = vmatpush.msra.mxu0 %v491
        %619 = vmatpush.msra.mxu0 %v484
        %620 = vmatpush.msra.mxu0 %v477
        %621 = vmatmul.f32.gmra.mxu0 %v476
        %v622 = vpop.f32.mrf.mxu0
        %v623 = vadd.f32 %v591, %v622
        %624 = vdwg.mxu0
        %625 = vmatpush.msra.mxu0 %v583
        %626 = vmatpush.msra.mxu0 %v576
        %627 = vmatpush.msra.mxu0 %v569
        %628 = vmatpush.msra.mxu0 %v562
        %629 = vmatpush.msra.mxu0 %v555
        %630 = vmatpush.msra.mxu0 %v548
        %631 = vmatpush.msra.mxu0 %v541
        %632 = vmatpush.msra.mxu0 %v534
        %633 = vmatpush.msra.mxu0 %v527
        %634 = vmatpush.msra.mxu0 %v520
        %635 = vmatpush.msra.mxu0 %v513
        %636 = vmatpush.msra.mxu0 %v506
        %637 = vmatpush.msra.mxu0 %v499
        %638 = vmatpush.msra.mxu0 %v492
        %639 = vmatpush.msra.mxu0 %v485
        %640 = vmatpush.msra.mxu0 %v478
        %641 = vmatmul.f32.gmra.mxu0 %v476
        %v642 = vpop.f32.mrf.mxu0
        %v643 = vadd.f32 %v592, %v642
        %644 = vdwg.mxu0
        %645 = vmatpush.msra.mxu0 %v584
        %646 = vmatpush.msra.mxu0 %v577
        %647 = vmatpush.msra.mxu0 %v570
        %648 = vmatpush.msra.mxu0 %v563
        %649 = vmatpush.msra.mxu0 %v556
        %650 = vmatpush.msra.mxu0 %v549
        %651 = vmatpush.msra.mxu0 %v542
        %652 = vmatpush.msra.mxu0 %v535
        %653 = vmatpush.msra.mxu0 %v528
        %654 = vmatpush.msra.mxu0 %v521
        %655 = vmatpush.msra.mxu0 %v514
        %656 = vmatpush.msra.mxu0 %v507
        %657 = vmatpush.msra.mxu0 %v500
        %658 = vmatpush.msra.mxu0 %v493
        %659 = vmatpush.msra.mxu0 %v486
        %660 = vmatpush.msra.mxu0 %v479
        %661 = vmatmul.f32.gmra.mxu0 %v476
        %v662 = vpop.f32.mrf.mxu0
        %v663 = vadd.f32 %v593, %v662
        %664 = vdwg.mxu0
        %665 = vmatpush.msra.mxu0 %v585
        %666 = vmatpush.msra.mxu0 %v578
        %667 = vmatpush.msra.mxu0 %v571
        %668 = vmatpush.msra.mxu0 %v564
        %669 = vmatpush.msra.mxu0 %v557
        %670 = vmatpush.msra.mxu0 %v550
        %671 = vmatpush.msra.mxu0 %v543
        %672 = vmatpush.msra.mxu0 %v536
        %673 = vmatpush.msra.mxu0 %v529
        %674 = vmatpush.msra.mxu0 %v522
        %675 = vmatpush.msra.mxu0 %v515
        %676 = vmatpush.msra.mxu0 %v508
        %677 = vmatpush.msra.mxu0 %v501
        %678 = vmatpush.msra.mxu0 %v494
        %679 = vmatpush.msra.mxu0 %v487
        %680 = vmatpush.msra.mxu0 %v480
        %681 = vmatmul.f32.gmra.mxu0 %v476
        %v682 = vpop.f32.mrf.mxu0
        %v683 = vadd.f32 %v594, %v682
        %684 = vdwg.mxu0
        %685 = vmatpush.msra.mxu0 %v586
        %686 = vmatpush.msra.mxu0 %v579
        %687 = vmatpush.msra.mxu0 %v572
        %688 = vmatpush.msra.mxu0 %v565
        %689 = vmatpush.msra.mxu0 %v558
        %690 = vmatpush.msra.mxu0 %v551
        %691 = vmatpush.msra.mxu0 %v544
        %692 = vmatpush.msra.mxu0 %v537
        %693 = vmatpush.msra.mxu0 %v530
        %694 = vmatpush.msra.mxu0 %v523
        %695 = vmatpush.msra.mxu0 %v516
        %696 = vmatpush.msra.mxu0 %v509
        %697 = vmatpush.msra.mxu0 %v502
        %698 = vmatpush.msra.mxu0 %v495
        %699 = vmatpush.msra.mxu0 %v488
        %700 = vmatpush.msra.mxu0 %v481
        %701 = vmatmul.f32.gmra.mxu0 %v476
        %v702 = vpop.f32.mrf.mxu0
        %v703 = vadd.f32 %v595, %v702
        %704 = vdwg.mxu0
        %705 = vmatpush.msra.mxu0 %v587
        %706 = vmatpush.msra.mxu0 %v580
        %707 = vmatpush.msra.mxu0 %v573
        %708 = vmatpush.msra.mxu0 %v566
        %709 = vmatpush.msra.mxu0 %v559
        %710 = vmatpush.msra.mxu0 %v552
        %711 = vmatpush.msra.mxu0 %v545
        %712 = vmatpush.msra.mxu0 %v538
        %713 = vmatpush.msra.mxu0 %v531
        %714 = vmatpush.msra.mxu0 %v524
        %715 = vmatpush.msra.mxu0 %v517
        %716 = vmatpush.msra.mxu0 %v510
        %717 = vmatpush.msra.mxu0 %v503
        %718 = vmatpush.msra.mxu0 %v496
        %719 = vmatpush.msra.mxu0 %v489
        %720 = vmatpush.msra.mxu0 %v482
        %721 = vmatmul.f32.gmra.mxu0 %v476
        %v722 = vpop.f32.mrf.mxu0
        %v723 = vadd.f32 %v596, %v722
        %724 = vdwg.mxu0
        %725 = vmatpush.msra.mxu0 %v588
        %726 = vmatpush.msra.mxu0 %v581
        %727 = vmatpush.msra.mxu0 %v574
        %728 = vmatpush.msra.mxu0 %v567
        %729 = vmatpush.msra.mxu0 %v560
        %730 = vmatpush.msra.mxu0 %v553
        %731 = vmatpush.msra.mxu0 %v546
        %732 = vmatpush.msra.mxu0 %v539
        %733 = vmatpush.msra.mxu0 %v532
        %734 = vmatpush.msra.mxu0 %v525
        %735 = vmatpush.msra.mxu0 %v518
        %736 = vmatpush.msra.mxu0 %v511
        %737 = vmatpush.msra.mxu0 %v504
        %738 = vmatpush.msra.mxu0 %v497
        %739 = vmatpush.msra.mxu0 %v490
        %740 = vmatpush.msra.mxu0 %v483
        %741 = vmatmul.f32.gmra.mxu0 %v476
        %v742 = vpop.f32.mrf.mxu0
        %v743 = vadd.f32 %v597, %v742
        %744 = vdwg.mxu0
        %v745 = vxor.u32 %v623, 2147483648
        %v746 = vxor.u32 %v643, 2147483648
        %v747 = vxor.u32 %v663, 2147483648
        %v748 = vxor.u32 %v683, 2147483648
        %v749 = vxor.u32 %v703, 2147483648
        %v750 = vxor.u32 %v723, 2147483648
        %v751 = vxor.u32 %v743, 2147483648
        %v752 = vmul.f32 %v745, 1.442695
        %v753 = vpow.pop %v752
        %v754 = vmul.f32 %v746, 1.442695
        %v755 = vpow.pop %v754
        %v756 = vmul.f32 %v747, 1.442695
        %v757 = vpow.pop %v756
        %v758 = vmul.f32 %v748, 1.442695
        %v759 = vpow.pop %v758
        %v760 = vmul.f32 %v749, 1.442695
        %v761 = vpow.pop %v760
        %v762 = vmul.f32 %v750, 1.442695
        %v763 = vpow.pop %v762
        %v764 = vmul.f32 %v751, 1.442695
        %v765 = vpow.pop %v764
        %v766 = vadd.f32 %v753, 1.0
        %v767 = vadd.f32 %v755, 1.0
        %v768 = vadd.f32 %v757, 1.0
        %v769 = vadd.f32 %v759, 1.0
        %v770 = vadd.f32 %v761, 1.0
        %v771 = vadd.f32 %v763, 1.0
        %v772 = vadd.f32 %v765, 1.0
        %v773 = vrcp.pop %v766
        %v774 = vmul.f32 %v766, %v773
        %v775 = vsub.f32 1.0, %v774
        %v776 = vmul.f32 %v773, %v775
        %v777 = vadd.f32 %v773, %v776
        %vm778 = vweird.f32 %v766
        %vm779 = vweird.f32 %v773
        %vm780 = vmor %vm778, %vm779
        %v781 = vsel %vm780, %v773, %v777
        %v782 = vand.u32 2147483647, %v766
        %vm783 = vcmp.eq.f32.partialorder %v782, 8.507059e+37
        %v784 = vand.u32 %v766, 2147483648
        %v785 = vor.u32 1.1754944e-38, %v784
        %v786 = vsel %vm783, %v785, %v781
        %v787 = vmul.f32 1.0, %v786
        %v788 = vrcp.pop %v767
        %v789 = vmul.f32 %v767, %v788
        %v790 = vsub.f32 1.0, %v789
        %v791 = vmul.f32 %v788, %v790
        %v792 = vadd.f32 %v788, %v791
        %vm793 = vweird.f32 %v767
        %vm794 = vweird.f32 %v788
        %vm795 = vmor %vm793, %vm794
        %v796 = vsel %vm795, %v788, %v792
        %v797 = vand.u32 2147483647, %v767
        %vm798 = vcmp.eq.f32.partialorder %v797, 8.507059e+37
        %v799 = vand.u32 %v767, 2147483648
        %v800 = vor.u32 1.1754944e-38, %v799
        %v801 = vsel %vm798, %v800, %v796
        %v802 = vmul.f32 1.0, %v801
        %v803 = vrcp.pop %v768
        %v804 = vmul.f32 %v768, %v803
        %v805 = vsub.f32 1.0, %v804
        %v806 = vmul.f32 %v803, %v805
        %v807 = vadd.f32 %v803, %v806
        %vm808 = vweird.f32 %v768
        %vm809 = vweird.f32 %v803
        %vm810 = vmor %vm808, %vm809
        %v811 = vsel %vm810, %v803, %v807
        %v812 = vand.u32 2147483647, %v768
        %vm813 = vcmp.eq.f32.partialorder %v812, 8.507059e+37
        %v814 = vand.u32 %v768, 2147483648
        %v815 = vor.u32 1.1754944e-38, %v814
        %v816 = vsel %vm813, %v815, %v811
        %v817 = vmul.f32 1.0, %v816
        %v818 = vrcp.pop %v769
        %v819 = vmul.f32 %v769, %v818
        %v820 = vsub.f32 1.0, %v819
        %v821 = vmul.f32 %v818, %v820
        %v822 = vadd.f32 %v818, %v821
        %vm823 = vweird.f32 %v769
        %vm824 = vweird.f32 %v818
        %vm825 = vmor %vm823, %vm824
        %v826 = vsel %vm825, %v818, %v822
        %v827 = vand.u32 2147483647, %v769
        %vm828 = vcmp.eq.f32.partialorder %v827, 8.507059e+37
        %v829 = vand.u32 %v769, 2147483648
        %v830 = vor.u32 1.1754944e-38, %v829
        %v831 = vsel %vm828, %v830, %v826
        %v832 = vmul.f32 1.0, %v831
        %v833 = vrcp.pop %v770
        %v834 = vmul.f32 %v770, %v833
        %v835 = vsub.f32 1.0, %v834
        %v836 = vmul.f32 %v833, %v835
        %v837 = vadd.f32 %v833, %v836
        %vm838 = vweird.f32 %v770
        %vm839 = vweird.f32 %v833
        %vm840 = vmor %vm838, %vm839
        %v841 = vsel %vm840, %v833, %v837
        %v842 = vand.u32 2147483647, %v770
        %vm843 = vcmp.eq.f32.partialorder %v842, 8.507059e+37
        %v844 = vand.u32 %v770, 2147483648
        %v845 = vor.u32 1.1754944e-38, %v844
        %v846 = vsel %vm843, %v845, %v841
        %v847 = vmul.f32 1.0, %v846
        %v848 = vrcp.pop %v771
        %v849 = vmul.f32 %v771, %v848
        %v850 = vsub.f32 1.0, %v849
        %v851 = vmul.f32 %v848, %v850
        %v852 = vadd.f32 %v848, %v851
        %vm853 = vweird.f32 %v771
        %vm854 = vweird.f32 %v848
        %vm855 = vmor %vm853, %vm854
        %v856 = vsel %vm855, %v848, %v852
        %v857 = vand.u32 2147483647, %v771
        %vm858 = vcmp.eq.f32.partialorder %v857, 8.507059e+37
        %v859 = vand.u32 %v771, 2147483648
        %v860 = vor.u32 1.1754944e-38, %v859
        %v861 = vsel %vm858, %v860, %v856
        %v862 = vmul.f32 1.0, %v861
        %v863 = vrcp.pop %v772
        %v864 = vmul.f32 %v772, %v863
        %v865 = vsub.f32 1.0, %v864
        %v866 = vmul.f32 %v863, %v865
        %v867 = vadd.f32 %v863, %v866
        %vm868 = vweird.f32 %v772
        %vm869 = vweird.f32 %v863
        %vm870 = vmor %vm868, %vm869
        %v871 = vsel %vm870, %v863, %v867
        %v872 = vand.u32 2147483647, %v772
        %vm873 = vcmp.eq.f32.partialorder %v872, 8.507059e+37
        %v874 = vand.u32 %v772, 2147483648
        %v875 = vor.u32 1.1754944e-38, %v874
        %v876 = vsel %vm873, %v875, %v871
        %v877 = vmul.f32 1.0, %v876
        %878 = vst [vmem:[%s217] sm:$0xff] %v787
        %879 = vst [vmem:[%s217 + $0x8] sm:$0xff] %v802
        %880 = vst [vmem:[%s217 + $0x10] sm:$0xff] %v817
        %881 = vst [vmem:[%s217 + $0x18] sm:$0xff] %v832
        %882 = vst [vmem:[%s217 + $0x20] sm:$0xff] %v847
        %883 = vst [vmem:[%s217 + $0x28] sm:$0xff] %v862
        %884 = vst.msk [vmem:[%s217 + $0x30] sm:$0xff] %vm332, %v877
        %s885 = sand.u32 %s137, 1
        %s886 = scalar_lea.sflag [#allocation3], %s885
        %s887 = sand.u32 %s137, 1
        %s888 = smul.addr %s887, 56
        %s889 = scalar_lea.vmem [#allocation2], %s888
        // Predicated region
        $region41: #{_autoencoder_pallas.1} parent=39 // pred_check
          %p890 = pneg %p147
        $region42: #{_autoencoder_pallas.1} parent=39 // pred_check_branch
          %892 = sbr.rel (%p890) target = $region44
        $region43: #{_autoencoder_pallas.1} parent=39 // pred_region
          %894 = vsyncadd %s886, 0
          %s895 = smul.addr %s19, 7
          %s896 = smul.addr %s895, 8
          %s897 = scalar_lea.hbm %s5, %s896
          %s899 = sshll.u32 %s889, 4
          %s900 = int_to_ptr.vmem [resolvable:$true] %s899
          %s901 = sshll.u32 %s897, 4
          %s902 = int_to_ptr.hbm [resolvable:$true] %s901
          %904 = dma.vmem_to_hbm [thread:$0]  %s900, 896, %s902, %s886
        $region44: #{_autoencoder_pallas.1} parent=39 // pred_fallthru
          _
      $region40: #{_autoencoder_pallas.1} parent=5 // pred_fallthru
        _
      %p905 = scmp.le.s32.totalorder 2, %s14
      // Predicated region
      $region45: #{_autoencoder_pallas.1} parent=5 // pred_check
        %p906 = pneg %p905
      $region46: #{_autoencoder_pallas.1} parent=5 // pred_check_branch
        %908 = sbr.rel (%p906) target = $region48
      $region47: #{_autoencoder_pallas.1} parent=5 // pred_region
        %s909 = ssub.s32 %s14, 2
        // Predicated region
        $region49: #{_autoencoder_pallas.1} parent=47 // pred_check
          %p910 = pneg %p153
        $region50: #{_autoencoder_pallas.1} parent=47 // pred_check_branch
          %912 = sbr.rel (%p910) target = $region52
        $region51: #{_autoencoder_pallas.1} parent=47 // pred_region
          %s913 = sand.u32 %s138, 1
          %s914 = scalar_lea.sflag [#allocation3], %s913
          %s915 = sand.u32 %s138, 1
          %s916 = smul.addr %s915, 56
          %s917 = scalar_lea.vmem [#allocation2], %s916
          %919 = dma.done %s914, 896
        $region52: #{_autoencoder_pallas.1} parent=47 // pred_fallthru
          _
      $region48: #{_autoencoder_pallas.1} parent=5 // pred_fallthru
        _
    $region6: #{_autoencoder_pallas.1} parent=1 // loop_footer
      %s18 = sadd.s32 1, %s14
    $region7: #{_autoencoder_pallas.1} parent=1 // loop_footer_branch
      %13 = sbr.rel target = $region3
    $region8: #{_autoencoder_pallas.1} parent=1 // loop_exit
      _
    %920 = vsyncpa [#allocation3], 1
    %s921 = scalar_lea.sflag [#allocation3], 1
    %922 = vsyncpa %s921, 1

</llo_original>
